<compile_context>
chip_gen: v6e
topology: v6e:2x2x1
jax: 0.10.0
libtpu: 0.0.40
codegen_flags: <defaults>
</compile_context>

<pallas_src>
import functools

import jax
import jax.numpy as jnp
import numpy as np
from jax import lax
from jax.experimental import pallas as pl
from jax.experimental.pallas import tpu as pltpu

LANE = 128
NEG_BIG = -1e9      # bias for padded vocab columns (kills them in the LSE)
NEG_INIT = -1e30    # finite running-max init (avoids inf arithmetic)


def _round_up(x, m):
    return (x + m - 1) // m * m


def _pick_chunk(T, max_chunk=16):
    """Largest divisor of T that is <= max_chunk (timesteps per grid step)."""
    for c in range(min(T, max_chunk), 0, -1):
        if T % c == 0:
            return c
    return 1


def _sigmoid(x):
    # Exact sigmoid via tanh: transcendental goes to the EUP (free bundle slot)
    # instead of a VPU divide on the serial recurrent critical path.
    return 0.5 * (jnp.tanh(0.5 * x) + 1.0)


# ----------------------------------------------------------------------------
# LSTM layer kernel: one chunk of timesteps per grid step.
# Inputs are pre-computed gates pre_gates[t] = x[t] @ W_ih + (b_ih + b_hh).
# ----------------------------------------------------------------------------
def _lstm_chunk_kernel(pg_ref, h0_ref, c0_ref, whh_ref,
                       y_ref, hT_ref, cT_ref, h_scr, c_scr):
    chunk = pg_ref.shape[0]          # static
    Hp = h0_ref.shape[-1]            # static, multiple of 128
    s = pl.program_id(0)

    @pl.when(s == 0)
    def _():
        h_scr[...] = h0_ref[...]
        c_scr[...] = c0_ref[...]

    whh = whh_ref[...]               # (Hp, 4Hp), resident across all grid steps
    h = h_scr[...]
    c = c_scr[...]

    # Static unroll of the per-chunk recurrence (chunk <= 16): static indices
    # -> lane/sublane-aligned loads/stores, full LLO scheduling visibility.
    for i in range(chunk):
        gates = pg_ref[i] + jnp.dot(h, whh, preferred_element_type=jnp.float32)
        i_g = _sigmoid(gates[:, 0 * Hp:1 * Hp])   # lane-aligned gate slices
        f_g = _sigmoid(gates[:, 1 * Hp:2 * Hp])
        g_g = jnp.tanh(gates[:, 2 * Hp:3 * Hp])
        o_g = _sigmoid(gates[:, 3 * Hp:4 * Hp])
        c = f_g * c + i_g * g_g
        h = o_g * jnp.tanh(c)
        y_ref[i] = h

    h_scr[...] = h
    c_scr[...] = c

    @pl.when(s == pl.num_programs(0) - 1)
    def _():
        hT_ref[...] = h
        cT_ref[...] = c


def lstm_layer(pre_gates, h0, c0, w_hh_t, chunk):
    """pre_gates: (T, B, 4Hp) f32; h0/c0: (B, Hp); w_hh_t: (Hp, 4Hp) f32."""
    T, B, G = pre_gates.shape
    Hp = G // 4
    num_chunks = T // chunk
    out_shapes = (
        jax.ShapeDtypeStruct((T, B, Hp), jnp.float32),   # per-step outputs
        jax.ShapeDtypeStruct((B, Hp), jnp.float32),      # final h
        jax.ShapeDtypeStruct((B, Hp), jnp.float32),      # final c
    )
    grid_spec = pltpu.PrefetchScalarGridSpec(
        num_scalar_prefetch=0,
        grid=(num_chunks,),
        in_specs=[
            pl.BlockSpec((chunk, B, G), lambda s: (s, 0, 0)),
            pl.BlockSpec((B, Hp), lambda s: (0, 0)),
            pl.BlockSpec((B, Hp), lambda s: (0, 0)),
            # TODO(synk): at large Hp, tile the 4Hp axis of W_hh (or cast bf16)
            # to keep the resident block inside v7x's 64 MiB VMEM.
            pl.BlockSpec((Hp, G), lambda s: (0, 0)),
        ],
        out_specs=[
            pl.BlockSpec((chunk, B, Hp), lambda s: (s, 0, 0)),
            pl.BlockSpec((B, Hp), lambda s: (0, 0)),
            pl.BlockSpec((B, Hp), lambda s: (0, 0)),
        ],
        scratch_shapes=[pltpu.VMEM((B, Hp), jnp.float32),
                        pltpu.VMEM((B, Hp), jnp.float32)],
    )
    return pl.pallas_call(
        _lstm_chunk_kernel,
        out_shape=out_shapes,
        grid_spec=grid_spec,
        compiler_params=pltpu.CompilerParams(
            dimension_semantics=("arbitrary",)),  # sequential recurrence
    )(pre_gates, h0, c0, w_hh_t)


# ----------------------------------------------------------------------------
# Fused bottleneck projections + decoder matmul + online log-sum-exp.
# Grid: (M tiles, vocab tiles).  dec_w streams tile-by-tile through VMEM;
# bn is computed once per M tile (vocab tile 0) and cached in scratch.
# Outputs: raw logits (Mp, Np) and per-row LSE (Mp, 1).
# ----------------------------------------------------------------------------
def _decode_kernel(h_ref, iv_ref, wl_ref, wi_ref, b_ref, wd_ref, bd_ref,
                   logits_ref, lse_ref, bn_scr, m_scr, s_scr, *, amp):
    n = pl.program_id(1)

    @pl.when(n == 0)
    def _():
        h = h_ref[...].astype(jnp.bfloat16)
        iv = (iv_ref[...] * amp).astype(jnp.bfloat16)   # ivec amplification
        bn_scr[...] = (
            jnp.dot(h, wl_ref[...], preferred_element_type=jnp.float32)
            + jnp.dot(iv, wi_ref[...], preferred_element_type=jnp.float32)
            + b_ref[...])
        m_scr[...] = jnp.full_like(m_scr, NEG_INIT)
        s_scr[...] = jnp.zeros_like(s_scr)

    logits = (jnp.dot(bn_scr[...].astype(jnp.bfloat16), wd_ref[...],
                      preferred_element_type=jnp.float32) + bd_ref[...])
    logits_ref[...] = logits                           # lane-dense (tm, tn) store

    t_max = jnp.max(logits, axis=-1, keepdims=True)
    m_new = jnp.maximum(m_scr[...], t_max)
    s_scr[...] = (s_scr[...] * jnp.exp(m_scr[...] - m_new)
                  + jnp.sum(jnp.exp(logits - m_new), axis=-1, keepdims=True))
    m_scr[...] = m_new

    @pl.when(n == pl.num_programs(1) - 1)
    def _():
        lse_ref[...] = m_scr[...] + jnp.log(s_scr[...])


def bottleneck_decode(out_flat, iv_flat, wl_t, wi_t, b_bn, dec_w_t, dec_b,
                      amp, tm, tn):
    Mp, Hp = out_flat.shape
    ivd = iv_flat.shape[-1]
    Np = dec_w_t.shape[-1]
    grid_spec = pltpu.PrefetchScalarGridSpec(
        num_scalar_prefetch=0,
        grid=(Mp // tm, Np // tn),
        in_specs=[
            pl.BlockSpec((tm, Hp), lambda m, n: (m, 0)),
            pl.BlockSpec((tm, ivd), lambda m, n: (m, 0)),
            pl.BlockSpec((Hp, Hp), lambda m, n: (0, 0)),
            pl.BlockSpec((ivd, Hp), lambda m, n: (0, 0)),
            pl.BlockSpec((1, Hp), lambda m, n: (0, 0)),
            pl.BlockSpec((Hp, tn), lambda m, n: (0, n)),   # dec_w streams over n
            pl.BlockSpec((1, tn), lambda m, n: (0, n)),
        ],
        out_specs=[
            pl.BlockSpec((tm, tn), lambda m, n: (m, n)),   # raw logits
            pl.BlockSpec((tm, 1), lambda m, n: (m, 0)),    # per-row LSE
        ],
        scratch_shapes=[
            pltpu.VMEM((tm, Hp), jnp.float32),   # cached bottleneck activations
            pltpu.VMEM((tm, 1), jnp.float32),    # running max
            pltpu.VMEM((tm, 1), jnp.float32),    # running sum-exp
        ],
    )
    return pl.pallas_call(
        functools.partial(_decode_kernel, amp=float(amp)),
        out_shape=(jax.ShapeDtypeStruct((Mp, Np), jnp.float32),
                   jax.ShapeDtypeStruct((Mp, 1), jnp.float32)),
        grid_spec=grid_spec,
        compiler_params=pltpu.CompilerParams(
            dimension_semantics=("parallel", "arbitrary")),
    )(out_flat, iv_flat, wl_t, wi_t, b_bn, dec_w_t, dec_b)


# ----------------------------------------------------------------------------
# Final normalization: out = logits - lse  (mem-bound, lane-dense tiles).
# ----------------------------------------------------------------------------
def _logsoftmax_finalize_kernel(logits_ref, lse_ref, out_ref):
    out_ref[...] = logits_ref[...] - lse_ref[...]


def logsoftmax_finalize(logits, lse, tm, tn):
    Mp, Np = logits.shape
    grid_spec = pltpu.PrefetchScalarGridSpec(
        num_scalar_prefetch=0,
        grid=(Mp // tm, Np // tn),
        in_specs=[pl.BlockSpec((tm, tn), lambda m, n: (m, n)),
                  pl.BlockSpec((tm, 1), lambda m, n: (m, 0))],
        out_specs=pl.BlockSpec((tm, tn), lambda m, n: (m, n)),
    )
    return pl.pallas_call(
        _logsoftmax_finalize_kernel,
        out_shape=jax.ShapeDtypeStruct((Mp, Np), jnp.float32),
        grid_spec=grid_spec,
        compiler_params=pltpu.CompilerParams(
            dimension_semantics=("parallel", "parallel")),
    )(logits, lse)


# ----------------------------------------------------------------------------
# Parameters (deterministic synthetic init, shapes per the module __init__)
# ----------------------------------------------------------------------------
def init_params(key, ntoken, ninp, nhid, nlayers, ivec_dim):
    initrange = 0.1
    keys = jax.random.split(key, 3 + nlayers)
    p = {}
    p['enc_w'] = jax.random.uniform(keys[0], (ntoken, ninp), jnp.float32,
                                    -initrange, initrange)
    std = 1.0 / float(np.sqrt(nhid))
    lstm = []
    for l in range(nlayers):
        in_dim = ninp if l == 0 else nhid
        k1, k2, k3, k4 = jax.random.split(keys[1 + l], 4)
        lstm.append((
            jax.random.uniform(k1, (4 * nhid, in_dim), jnp.float32, -std, std),
            jax.random.uniform(k2, (4 * nhid, nhid), jnp.float32, -std, std),
            jax.random.uniform(k3, (4 * nhid,), jnp.float32, -std, std),
            jax.random.uniform(k4, (4 * nhid,), jnp.float32, -std, std),
        ))
    p['lstm'] = lstm
    kl, ki, kd = jax.random.split(keys[1 + nlayers], 3)
    # weight_norm'd bottleneck projections: store (v, g); g init to ||v|| row
    p['v_l'] = jax.random.uniform(kl, (nhid, nhid), jnp.float32,
                                  -initrange, initrange)
    p['g_l'] = jnp.linalg.norm(p['v_l'], axis=1, keepdims=True)
    p['bl'] = jnp.zeros((nhid,), jnp.float32)
    p['v_i'] = jax.random.uniform(ki, (nhid, ivec_dim), jnp.float32,
                                  -initrange, initrange)
    p['g_i'] = jnp.linalg.norm(p['v_i'], axis=1, keepdims=True)
    p['bi'] = jnp.zeros((nhid,), jnp.float32)
    p['dec_w'] = jax.random.uniform(kd, (ntoken, nhid), jnp.float32,
                                    -initrange, initrange)
    p['dec_b'] = jnp.zeros((ntoken,), jnp.float32)
    return p


# ----------------------------------------------------------------------------
# One-time weight preparation: transpose, lane-pad, weight-norm, bf16 cast.
# ----------------------------------------------------------------------------
def prepare_params(params, ntoken, ninp, nhid, nlayers, ivec_dim):
    Hp = _round_up(nhid, LANE)
    tn = min(1024, _round_up(ntoken, LANE))    # vocab tile, multiple of 128
    Np = _round_up(ntoken, tn)

    def pad_gate_cols(w_t):                    # (in, 4H) -> (in, 4Hp)
        return jnp.concatenate(
            [jnp.pad(w_t[:, g * nhid:(g + 1) * nhid],
                     ((0, 0), (0, Hp - nhid))) for g in range(4)], axis=1)

    def pad_gate_vec(b):                       # (4H,) -> (1, 4Hp)
        return jnp.concatenate(
            [jnp.pad(b[g * nhid:(g + 1) * nhid], (0, Hp - nhid))
             for g in range(4)]).reshape(1, 4 * Hp)

    w_ih_t, w_hh_t, b_gate = [], [], []
    for l, (w_ih, w_hh, b_ih, b_hh) in enumerate(params['lstm']):
        wiht = pad_gate_cols(jnp.transpose(w_ih))            # (in, 4Hp)
        if l > 0:                                            # input is padded Hp
            wiht = jnp.pad(wiht, ((0, Hp - nhid), (0, 0)))
        whht = jnp.pad(pad_gate_cols(jnp.transpose(w_hh)),
                       ((0, Hp - nhid), (0, 0)))             # (Hp, 4Hp)
        w_ih_t.append(wiht.astype(jnp.bfloat16))  # non-recurrent: bf16 is safe
        w_hh_t.append(whht.astype(jnp.float32))   # recurrent path kept f32
        b_gate.append(pad_gate_vec(b_ih + b_hh).astype(jnp.float32))

    def wnorm(g, v):                           # w = g * v / ||v||_row
        return g * v / jnp.linalg.norm(v, axis=1, keepdims=True)

    wl = wnorm(params['g_l'], params['v_l'])                 # (nhid, nhid)
    wi = wnorm(params['g_i'], params['v_i'])                 # (nhid, ivec_dim)
    wl_t = jnp.pad(jnp.transpose(wl), ((0, Hp - nhid), (0, Hp - nhid)))
    wi_t = jnp.pad(jnp.transpose(wi), ((0, 0), (0, Hp - nhid)))
    b_bn = jnp.pad(params['bl'] + params['bi'], (0, Hp - nhid)).reshape(1, Hp)

    dec_w_t = jnp.pad(jnp.transpose(params['dec_w']),
                      ((0, Hp - nhid), (0, Np - ntoken)))    # (Hp, Np)
    dec_b = jnp.pad(params['dec_b'], (0, Np - ntoken),
                    constant_values=NEG_BIG).reshape(1, Np)

    return {
        'meta': dict(ntoken=ntoken, ninp=ninp, nhid=nhid, nlayers=nlayers,
                     ivec_dim=ivec_dim, Hp=Hp, Np=Np, tn=tn),
        'enc_w': params['enc_w'],
        'w_ih_t': w_ih_t, 'w_hh_t': w_hh_t, 'b_gate': b_gate,
        'wl_t': wl_t.astype(jnp.bfloat16),
        'wi_t': wi_t.astype(jnp.bfloat16),
        'b_bn': b_bn.astype(jnp.float32),
        'dec_w_t': dec_w_t.astype(jnp.bfloat16),
        'dec_b': dec_b.astype(jnp.float32),
    }


# ----------------------------------------------------------------------------
# Forward pass (Pallas)
# ----------------------------------------------------------------------------
def forward(prep, input_ids, hidden, ivec, ivec_amplification=1.0):
    meta = prep['meta']
    H, Hp, Np, tn = meta['nhid'], meta['Hp'], meta['Np'], meta['tn']
    ntoken, nlayers = meta['ntoken'], meta['nlayers']
    T, B = input_ids.shape
    ivd = ivec.shape[-1]
    h0, c0 = hidden                                   # (nlayers, B, H)

    # Embedding gather (data-dependent row gather, kept in XLA); dropout = id.
    x = jnp.take(prep['enc_w'], input_ids, axis=0)    # (T, B, ninp)

    chunk = _pick_chunk(T)
    hT_list, cT_list = [], []
    for l in range(nlayers):
        # Hoisted input projection: one big MXU matmul over all T*B rows
        # (bf16 operands, f32 accumulation), biases folded in.
        x2 = x.reshape(T * B, x.shape[-1]).astype(jnp.bfloat16)
        pre = (jnp.dot(x2, prep['w_ih_t'][l],
                       preferred_element_type=jnp.float32)
               + prep['b_gate'][l]).reshape(T, B, 4 * Hp)
        h0p = jnp.pad(h0[l], ((0, 0), (0, Hp - H)))
        c0p = jnp.pad(c0[l], ((0, 0), (0, Hp - H)))
        y, hTl, cTl = lstm_layer(pre, h0p, c0p, prep['w_hh_t'][l], chunk)
        x = y                                         # inter-layer dropout: id
        hT_list.append(hTl[:, :H])
        cT_list.append(cTl[:, :H])

    # Decoder over the flattened (T*B) row axis; vocab tiled inside the kernel.
    M = T * B
    tm = min(256, _round_up(M, 8))
    Mp = _round_up(M, tm)
    out_flat = jnp.pad(x.reshape(M, Hp), ((0, Mp - M), (0, 0)))
    iv_flat = jnp.pad(ivec.reshape(M, ivd), ((0, Mp - M), (0, 0)))

    logits, lse = bottleneck_decode(
        out_flat, iv_flat, prep['wl_t'], prep['wi_t'], prep['b_bn'],
        prep['dec_w_t'], prep['dec_b'], ivec_amplification, tm, tn)
    normed = logsoftmax_finalize(logits, lse, tm, tn)
    decoded = normed[:M, :ntoken].reshape(T, B, ntoken)
    return decoded, (jnp.stack(hT_list), jnp.stack(cT_list))


# ----------------------------------------------------------------------------
# Pure-JAX f32 reference (for verification)
# ----------------------------------------------------------------------------
def reference_forward(params, input_ids, hidden, ivec, amp):
    h0, c0 = hidden
    x = jnp.take(params['enc_w'], input_ids, axis=0)
    hs, cs = [], []
    for l, (w_ih, w_hh, b_ih, b_hh) in enumerate(params['lstm']):
        def step(carry, xt, w_ih=w_ih, w_hh=w_hh, b_ih=b_ih, b_hh=b_hh):
            h, c = carry
            gates = xt @ w_ih.T + b_ih + h @ w_hh.T + b_hh
            H = h.shape[-1]
            i = jax.nn.sigmoid(gates[:, :H])
            f = jax.nn.sigmoid(gates[:, H:2 * H])
            g = jnp.tanh(gates[:, 2 * H:3 * H])
            o = jax.nn.sigmoid(gates[:, 3 * H:])
            c2 = f * c + i * g
            h2 = o * jnp.tanh(c2)
            return (h2, c2), h2
        (hT, cT), ys = jax.lax.scan(step, (h0[l], c0[l]), x)
        x = ys
        hs.append(hT)
        cs.append(cT)
    wl = params['g_l'] * params['v_l'] / jnp.linalg.norm(
        params['v_l'], axis=1, keepdims=True)
    wi = params['g_i'] * params['v_i'] / jnp.linalg.norm(
        params['v_i'], axis=1, keepdims=True)
    bn = x @ wl.T + params['bl'] + (amp * ivec) @ wi.T + params['bi']
    logits = bn @ params['dec_w'].T + params['dec_b']
    return jax.nn.log_softmax(logits, axis=2), (jnp.stack(hs), jnp.stack(cs))


if __name__ == "__main__":
    ntoken, ninp, nhid, nlayers, ivec_dim = 64, 32, 32, 2, 16
    T, B = 8, 2
    amp = 1.5

    key = jax.random.PRNGKey(0)
    pkey, ikey, vkey = jax.random.split(key, 3)
    params = init_params(pkey, ntoken, ninp, nhid, nlayers, ivec_dim)
    prep = prepare_params(params, ntoken, ninp, nhid, nlayers, ivec_dim)

    input_ids = jax.random.randint(ikey, (T, B), 0, ntoken)          # (T, B)
    ivec = jax.random.uniform(vkey, (T, B, ivec_dim), jnp.float32, -1.0, 1.0)
    hidden = (jnp.zeros((nlayers, B, nhid), jnp.float32),
              jnp.zeros((nlayers, B, nhid), jnp.float32))

    decoded, (hT, cT) = forward(prep, input_ids, hidden, ivec, amp)
    jax.block_until_ready((decoded, hT, cT))

    ref_dec, (rh, rc) = reference_forward(params, input_ids, hidden, ivec, amp)
    # bf16 matmul operands in the kernels vs. the pure-f32 reference -> use a
    # modest tolerance (accumulation is f32 everywhere, so error is bounded).
    np.testing.assert_allclose(np.asarray(decoded), np.asarray(ref_dec),
                               atol=2e-2, rtol=2e-2)
    np.testing.assert_allclose(np.asarray(hT), np.asarray(rh),
                               atol=2e-2, rtol=2e-2)
    np.testing.assert_allclose(np.asarray(cT), np.asarray(rc),
                               atol=2e-2, rtol=2e-2)
    print("KERNEL_OK")
</pallas_src>

<mosaic_0001>
module attributes {stable_mosaic.version = 11 : i64} {
  func.func @_lstm_chunk_kernel(%arg0: i32, %arg1: memref<8x2x512xf32, #tpu.memory_space<vmem>>, %arg2: memref<2x128xf32, #tpu.memory_space<vmem>>, %arg3: memref<2x128xf32, #tpu.memory_space<vmem>>, %arg4: memref<128x512xf32, #tpu.memory_space<vmem>>, %arg5: memref<8x2x128xf32, #tpu.memory_space<vmem>>, %arg6: memref<2x128xf32, #tpu.memory_space<vmem>>, %arg7: memref<2x128xf32, #tpu.memory_space<vmem>>, %arg8: memref<2x128xf32, #tpu.memory_space<vmem>>, %arg9: memref<2x128xf32, #tpu.memory_space<vmem>>) attributes {dimension_semantics = [#tpu.dimension_semantics<arbitrary>], iteration_bounds = array<i64: 1>, scalar_prefetch = 0 : i64, scratch_operands = 2 : i64, tpu.core_type = #tpu.core_type<tc>, window_params = [{transform_indices = @transform_0, window_bounds = array<i64: 8, 2, 512>}, {pipeline_mode = #tpu.pipeline_mode<synchronous>, transform_indices = @transform_1, window_bounds = array<i64: 2, 128>}, {pipeline_mode = #tpu.pipeline_mode<synchronous>, transform_indices = @transform_2, window_bounds = array<i64: 2, 128>}, {pipeline_mode = #tpu.pipeline_mode<synchronous>, transform_indices = @transform_3, window_bounds = array<i64: 128, 512>}, {transform_indices = @transform_4, window_bounds = array<i64: 8, 2, 128>}, {pipeline_mode = #tpu.pipeline_mode<synchronous>, transform_indices = @transform_5, window_bounds = array<i64: 2, 128>}, {pipeline_mode = #tpu.pipeline_mode<synchronous>, transform_indices = @transform_6, window_bounds = array<i64: 2, 128>}]} {
    %c0_i32 = arith.constant 0 : i32
    %0 = arith.cmpi eq, %arg0, %c0_i32 : i32
    %1 = arith.extui %0 : i1 to i32
    %c0_i32_0 = arith.constant 0 : i32
    %2 = arith.cmpi ne, %1, %c0_i32_0 : i32
    scf.if %2 {
      %c0_132 = arith.constant 0 : index
      %c0_133 = arith.constant 0 : index
      %315 = vector.load %arg2[%c0_132, %c0_133] : memref<2x128xf32, #tpu.memory_space<vmem>>, vector<2x128xf32>
      %c0_134 = arith.constant 0 : index
      %c0_135 = arith.constant 0 : index
      %316 = vector.load %arg8[%c0_134, %c0_135] : memref<2x128xf32, #tpu.memory_space<vmem>>, vector<2x128xf32>
      tpu.vector_store %arg8[%c0_134, %c0_135], %315 {strides = array<i32>} : memref<2x128xf32, #tpu.memory_space<vmem>>, vector<2x128xf32>,
      %c0_136 = arith.constant 0 : index
      %c0_137 = arith.constant 0 : index
      %317 = vector.load %arg3[%c0_136, %c0_137] : memref<2x128xf32, #tpu.memory_space<vmem>>, vector<2x128xf32>
      %c0_138 = arith.constant 0 : index
      %c0_139 = arith.constant 0 : index
      %318 = vector.load %arg9[%c0_138, %c0_139] : memref<2x128xf32, #tpu.memory_space<vmem>>, vector<2x128xf32>
      tpu.vector_store %arg9[%c0_138, %c0_139], %317 {strides = array<i32>} : memref<2x128xf32, #tpu.memory_space<vmem>>, vector<2x128xf32>,
    } else {
    }
    %c0 = arith.constant 0 : index
    %c0_1 = arith.constant 0 : index
    %3 = vector.load %arg4[%c0, %c0_1] : memref<128x512xf32, #tpu.memory_space<vmem>>, vector<128x512xf32>
    %c0_2 = arith.constant 0 : index
    %c0_3 = arith.constant 0 : index
    %4 = vector.load %arg8[%c0_2, %c0_3] : memref<2x128xf32, #tpu.memory_space<vmem>>, vector<2x128xf32>
    %c0_4 = arith.constant 0 : index
    %c0_5 = arith.constant 0 : index
    %5 = vector.load %arg9[%c0_4, %c0_5] : memref<2x128xf32, #tpu.memory_space<vmem>>, vector<2x128xf32>
    %c0_6 = arith.constant 0 : index
    %c0_7 = arith.constant 0 : index
    %c0_8 = arith.constant 0 : index
    %6 = vector.load %arg1[%c0_6, %c0_7, %c0_8] : memref<8x2x512xf32, #tpu.memory_space<vmem>>, vector<1x2x512xf32>
    %7 = vector.shape_cast %6 : vector<1x2x512xf32> to vector<2x512xf32>
    %cst = arith.constant dense<0.000000e+00> : vector<2x512xf32>
    %8 = tpu.matmul %4, %3, %cst {dimension_numbers = #tpu.dot_dimension_numbers<[1], [0], [0], [1], [0, 0, 1, 1], [], []>} : vector<2x128xf32>, vector<128x512xf32>, vector<2x512xf32> -> vector<2x512xf32>
    %9 = arith.addf %7, %8 : vector<2x512xf32>
    %10 = vector.extract_strided_slice %9 {offsets = [0, 0], sizes = [2, 128], strides = [1, 1]} : vector<2x512xf32> to vector<2x128xf32>
    %cst_9 = arith.constant 5.000000e-01 : f32
    %11 = vector.broadcast %cst_9 : f32 to vector<2x128xf32>
    %12 = arith.mulf %11, %10 : vector<2x128xf32>
    %13 = math.tanh %12 : vector<2x128xf32>
    %cst_10 = arith.constant 1.000000e+00 : f32
    %14 = vector.broadcast %cst_10 : f32 to vector<2x128xf32>
    %15 = arith.addf %13, %14 : vector<2x128xf32>
    %cst_11 = arith.constant 5.000000e-01 : f32
    %16 = vector.broadcast %cst_11 : f32 to vector<2x128xf32>
    %17 = arith.mulf %16, %15 : vector<2x128xf32>
    %18 = vector.extract_strided_slice %9 {offsets = [0, 128], sizes = [2, 128], strides = [1, 1]} : vector<2x512xf32> to vector<2x128xf32>
    %cst_12 = arith.constant 5.000000e-01 : f32
    %19 = vector.broadcast %cst_12 : f32 to vector<2x128xf32>
    %20 = arith.mulf %19, %18 : vector<2x128xf32>
    %21 = math.tanh %20 : vector<2x128xf32>
    %cst_13 = arith.constant 1.000000e+00 : f32
    %22 = vector.broadcast %cst_13 : f32 to vector<2x128xf32>
    %23 = arith.addf %21, %22 : vector<2x128xf32>
    %cst_14 = arith.constant 5.000000e-01 : f32
    %24 = vector.broadcast %cst_14 : f32 to vector<2x128xf32>
    %25 = arith.mulf %24, %23 : vector<2x128xf32>
    %26 = vector.extract_strided_slice %9 {offsets = [0, 256], sizes = [2, 128], strides = [1, 1]} : vector<2x512xf32> to vector<2x128xf32>
    %27 = math.tanh %26 : vector<2x128xf32>
    %28 = vector.extract_strided_slice %9 {offsets = [0, 384], sizes = [2, 128], strides = [1, 1]} : vector<2x512xf32> to vector<2x128xf32>
    %cst_15 = arith.constant 5.000000e-01 : f32
    %29 = vector.broadcast %cst_15 : f32 to vector<2x128xf32>
    %30 = arith.mulf %29, %28 : vector<2x128xf32>
    %31 = math.tanh %30 : vector<2x128xf32>
    %cst_16 = arith.constant 1.000000e+00 : f32
    %32 = vector.broadcast %cst_16 : f32 to vector<2x128xf32>
    %33 = arith.addf %31, %32 : vector<2x128xf32>
    %cst_17 = arith.constant 5.000000e-01 : f32
    %34 = vector.broadcast %cst_17 : f32 to vector<2x128xf32>
    %35 = arith.mulf %34, %33 : vector<2x128xf32>
    %36 = arith.mulf %25, %5 : vector<2x128xf32>
    %37 = arith.mulf %17, %27 : vector<2x128xf32>
    %38 = arith.addf %36, %37 : vector<2x128xf32>
    %39 = math.tanh %38 : vector<2x128xf32>
    %40 = arith.mulf %35, %39 : vector<2x128xf32>
    %c0_18 = arith.constant 0 : index
    %c0_19 = arith.constant 0 : index
    %c0_20 = arith.constant 0 : index
    %41 = vector.load %arg5[%c0_18, %c0_19, %c0_20] : memref<8x2x128xf32, #tpu.memory_space<vmem>>, vector<1x2x128xf32>
    %42 = vector.shape_cast %41 : vector<1x2x128xf32> to vector<2x128xf32>
    %43 = vector.shape_cast %40 : vector<2x128xf32> to vector<1x2x128xf32>
    tpu.vector_store %arg5[%c0_18, %c0_19, %c0_20], %43 {strides = array<i32>} : memref<8x2x128xf32, #tpu.memory_space<vmem>>, vector<1x2x128xf32>,
    %c1 = arith.constant 1 : index
    %c0_21 = arith.constant 0 : index
    %c0_22 = arith.constant 0 : index
    %44 = vector.load %arg1[%c1, %c0_21, %c0_22] : memref<8x2x512xf32, #tpu.memory_space<vmem>>, vector<1x2x512xf32>
    %45 = vector.shape_cast %44 : vector<1x2x512xf32> to vector<2x512xf32>
    %cst_23 = arith.constant dense<0.000000e+00> : vector<2x512xf32>
    %46 = tpu.matmul %40, %3, %cst_23 {dimension_numbers = #tpu.dot_dimension_numbers<[1], [0], [0], [1], [0, 0, 1, 1], [], []>} : vector<2x128xf32>, vector<128x512xf32>, vector<2x512xf32> -> vector<2x512xf32>
    %47 = arith.addf %45, %46 : vector<2x512xf32>
    %48 = vector.extract_strided_slice %47 {offsets = [0, 0], sizes = [2, 128], strides = [1, 1]} : vector<2x512xf32> to vector<2x128xf32>
    %cst_24 = arith.constant 5.000000e-01 : f32
    %49 = vector.broadcast %cst_24 : f32 to vector<2x128xf32>
    %50 = arith.mulf %49, %48 : vector<2x128xf32>
    %51 = math.tanh %50 : vector<2x128xf32>
    %cst_25 = arith.constant 1.000000e+00 : f32
    %52 = vector.broadcast %cst_25 : f32 to vector<2x128xf32>
    %53 = arith.addf %51, %52 : vector<2x128xf32>
    %cst_26 = arith.constant 5.000000e-01 : f32
    %54 = vector.broadcast %cst_26 : f32 to vector<2x128xf32>
    %55 = arith.mulf %54, %53 : vector<2x128xf32>
    %56 = vector.extract_strided_slice %47 {offsets = [0, 128], sizes = [2, 128], strides = [1, 1]} : vector<2x512xf32> to vector<2x128xf32>
    %cst_27 = arith.constant 5.000000e-01 : f32
    %57 = vector.broadcast %cst_27 : f32 to vector<2x128xf32>
    %58 = arith.mulf %57, %56 : vector<2x128xf32>
    %59 = math.tanh %58 : vector<2x128xf32>
    %cst_28 = arith.constant 1.000000e+00 : f32
    %60 = vector.broadcast %cst_28 : f32 to vector<2x128xf32>
    %61 = arith.addf %59, %60 : vector<2x128xf32>
    %cst_29 = arith.constant 5.000000e-01 : f32
    %62 = vector.broadcast %cst_29 : f32 to vector<2x128xf32>
    %63 = arith.mulf %62, %61 : vector<2x128xf32>
    %64 = vector.extract_strided_slice %47 {offsets = [0, 256], sizes = [2, 128], strides = [1, 1]} : vector<2x512xf32> to vector<2x128xf32>
    %65 = math.tanh %64 : vector<2x128xf32>
    %66 = vector.extract_strided_slice %47 {offsets = [0, 384], sizes = [2, 128], strides = [1, 1]} : vector<2x512xf32> to vector<2x128xf32>
    %cst_30 = arith.constant 5.000000e-01 : f32
    %67 = vector.broadcast %cst_30 : f32 to vector<2x128xf32>
    %68 = arith.mulf %67, %66 : vector<2x128xf32>
    %69 = math.tanh %68 : vector<2x128xf32>
    %cst_31 = arith.constant 1.000000e+00 : f32
    %70 = vector.broadcast %cst_31 : f32 to vector<2x128xf32>
    %71 = arith.addf %69, %70 : vector<2x128xf32>
    %cst_32 = arith.constant 5.000000e-01 : f32
    %72 = vector.broadcast %cst_32 : f32 to vector<2x128xf32>
    %73 = arith.mulf %72, %71 : vector<2x128xf32>
    %74 = arith.mulf %63, %38 : vector<2x128xf32>
    %75 = arith.mulf %55, %65 : vector<2x128xf32>
    %76 = arith.addf %74, %75 : vector<2x128xf32>
    %77 = math.tanh %76 : vector<2x128xf32>
    %78 = arith.mulf %73, %77 : vector<2x128xf32>
    %c1_33 = arith.constant 1 : index
    %c0_34 = arith.constant 0 : index
    %c0_35 = arith.constant 0 : index
    %79 = vector.load %arg5[%c1_33, %c0_34, %c0_35] : memref<8x2x128xf32, #tpu.memory_space<vmem>>, vector<1x2x128xf32>
    %80 = vector.shape_cast %79 : vector<1x2x128xf32> to vector<2x128xf32>
    %81 = vector.shape_cast %78 : vector<2x128xf32> to vector<1x2x128xf32>
    tpu.vector_store %arg5[%c1_33, %c0_34, %c0_35], %81 {strides = array<i32>} : memref<8x2x128xf32, #tpu.memory_space<vmem>>, vector<1x2x128xf32>,
    %c2 = arith.constant 2 : index
    %c0_36 = arith.constant 0 : index
    %c0_37 = arith.constant 0 : index
    %82 = vector.load %arg1[%c2, %c0_36, %c0_37] : memref<8x2x512xf32, #tpu.memory_space<vmem>>, vector<1x2x512xf32>
    %83 = vector.shape_cast %82 : vector<1x2x512xf32> to vector<2x512xf32>
    %cst_38 = arith.constant dense<0.000000e+00> : vector<2x512xf32>
    %84 = tpu.matmul %78, %3, %cst_38 {dimension_numbers = #tpu.dot_dimension_numbers<[1], [0], [0], [1], [0, 0, 1, 1], [], []>} : vector<2x128xf32>, vector<128x512xf32>, vector<2x512xf32> -> vector<2x512xf32>
    %85 = arith.addf %83, %84 : vector<2x512xf32>
    %86 = vector.extract_strided_slice %85 {offsets = [0, 0], sizes = [2, 128], strides = [1, 1]} : vector<2x512xf32> to vector<2x128xf32>
    %cst_39 = arith.constant 5.000000e-01 : f32
    %87 = vector.broadcast %cst_39 : f32 to vector<2x128xf32>
    %88 = arith.mulf %87, %86 : vector<2x128xf32>
    %89 = math.tanh %88 : vector<2x128xf32>
    %cst_40 = arith.constant 1.000000e+00 : f32
    %90 = vector.broadcast %cst_40 : f32 to vector<2x128xf32>
    %91 = arith.addf %89, %90 : vector<2x128xf32>
    %cst_41 = arith.constant 5.000000e-01 : f32
    %92 = vector.broadcast %cst_41 : f32 to vector<2x128xf32>
    %93 = arith.mulf %92, %91 : vector<2x128xf32>
    %94 = vector.extract_strided_slice %85 {offsets = [0, 128], sizes = [2, 128], strides = [1, 1]} : vector<2x512xf32> to vector<2x128xf32>
    %cst_42 = arith.constant 5.000000e-01 : f32
    %95 = vector.broadcast %cst_42 : f32 to vector<2x128xf32>
    %96 = arith.mulf %95, %94 : vector<2x128xf32>
    %97 = math.tanh %96 : vector<2x128xf32>
    %cst_43 = arith.constant 1.000000e+00 : f32
    %98 = vector.broadcast %cst_43 : f32 to vector<2x128xf32>
    %99 = arith.addf %97, %98 : vector<2x128xf32>
    %cst_44 = arith.constant 5.000000e-01 : f32
    %100 = vector.broadcast %cst_44 : f32 to vector<2x128xf32>
    %101 = arith.mulf %100, %99 : vector<2x128xf32>
    %102 = vector.extract_strided_slice %85 {offsets = [0, 256], sizes = [2, 128], strides = [1, 1]} : vector<2x512xf32> to vector<2x128xf32>
    %103 = math.tanh %102 : vector<2x128xf32>
    %104 = vector.extract_strided_slice %85 {offsets = [0, 384], sizes = [2, 128], strides = [1, 1]} : vector<2x512xf32> to vector<2x128xf32>
    %cst_45 = arith.constant 5.000000e-01 : f32
    %105 = vector.broadcast %cst_45 : f32 to vector<2x128xf32>
    %106 = arith.mulf %105, %104 : vector<2x128xf32>
    %107 = math.tanh %106 : vector<2x128xf32>
    %cst_46 = arith.constant 1.000000e+00 : f32
    %108 = vector.broadcast %cst_46 : f32 to vector<2x128xf32>
    %109 = arith.addf %107, %108 : vector<2x128xf32>
    %cst_47 = arith.constant 5.000000e-01 : f32
    %110 = vector.broadcast %cst_47 : f32 to vector<2x128xf32>
    %111 = arith.mulf %110, %109 : vector<2x128xf32>
    %112 = arith.mulf %101, %76 : vector<2x128xf32>
    %113 = arith.mulf %93, %103 : vector<2x128xf32>
    %114 = arith.addf %112, %113 : vector<2x128xf32>
    %115 = math.tanh %114 : vector<2x128xf32>
    %116 = arith.mulf %111, %115 : vector<2x128xf32>
    %c2_48 = arith.constant 2 : index
    %c0_49 = arith.constant 0 : index
    %c0_50 = arith.constant 0 : index
    %117 = vector.load %arg5[%c2_48, %c0_49, %c0_50] : memref<8x2x128xf32, #tpu.memory_space<vmem>>, vector<1x2x128xf32>
    %118 = vector.shape_cast %117 : vector<1x2x128xf32> to vector<2x128xf32>
    %119 = vector.shape_cast %116 : vector<2x128xf32> to vector<1x2x128xf32>
    tpu.vector_store %arg5[%c2_48, %c0_49, %c0_50], %119 {strides = array<i32>} : memref<8x2x128xf32, #tpu.memory_space<vmem>>, vector<1x2x128xf32>,
    %c3 = arith.constant 3 : index
    %c0_51 = arith.constant 0 : index
    %c0_52 = arith.constant 0 : index
    %120 = vector.load %arg1[%c3, %c0_51, %c0_52] : memref<8x2x512xf32, #tpu.memory_space<vmem>>, vector<1x2x512xf32>
    %121 = vector.shape_cast %120 : vector<1x2x512xf32> to vector<2x512xf32>
    %cst_53 = arith.constant dense<0.000000e+00> : vector<2x512xf32>
    %122 = tpu.matmul %116, %3, %cst_53 {dimension_numbers = #tpu.dot_dimension_numbers<[1], [0], [0], [1], [0, 0, 1, 1], [], []>} : vector<2x128xf32>, vector<128x512xf32>, vector<2x512xf32> -> vector<2x512xf32>
    %123 = arith.addf %121, %122 : vector<2x512xf32>
    %124 = vector.extract_strided_slice %123 {offsets = [0, 0], sizes = [2, 128], strides = [1, 1]} : vector<2x512xf32> to vector<2x128xf32>
    %cst_54 = arith.constant 5.000000e-01 : f32
    %125 = vector.broadcast %cst_54 : f32 to vector<2x128xf32>
    %126 = arith.mulf %125, %124 : vector<2x128xf32>
    %127 = math.tanh %126 : vector<2x128xf32>
    %cst_55 = arith.constant 1.000000e+00 : f32
    %128 = vector.broadcast %cst_55 : f32 to vector<2x128xf32>
    %129 = arith.addf %127, %128 : vector<2x128xf32>
    %cst_56 = arith.constant 5.000000e-01 : f32
    %130 = vector.broadcast %cst_56 : f32 to vector<2x128xf32>
    %131 = arith.mulf %130, %129 : vector<2x128xf32>
    %132 = vector.extract_strided_slice %123 {offsets = [0, 128], sizes = [2, 128], strides = [1, 1]} : vector<2x512xf32> to vector<2x128xf32>
    %cst_57 = arith.constant 5.000000e-01 : f32
    %133 = vector.broadcast %cst_57 : f32 to vector<2x128xf32>
    %134 = arith.mulf %133, %132 : vector<2x128xf32>
    %135 = math.tanh %134 : vector<2x128xf32>
    %cst_58 = arith.constant 1.000000e+00 : f32
    %136 = vector.broadcast %cst_58 : f32 to vector<2x128xf32>
    %137 = arith.addf %135, %136 : vector<2x128xf32>
    %cst_59 = arith.constant 5.000000e-01 : f32
    %138 = vector.broadcast %cst_59 : f32 to vector<2x128xf32>
    %139 = arith.mulf %138, %137 : vector<2x128xf32>
    %140 = vector.extract_strided_slice %123 {offsets = [0, 256], sizes = [2, 128], strides = [1, 1]} : vector<2x512xf32> to vector<2x128xf32>
    %141 = math.tanh %140 : vector<2x128xf32>
    %142 = vector.extract_strided_slice %123 {offsets = [0, 384], sizes = [2, 128], strides = [1, 1]} : vector<2x512xf32> to vector<2x128xf32>
    %cst_60 = arith.constant 5.000000e-01 : f32
    %143 = vector.broadcast %cst_60 : f32 to vector<2x128xf32>
    %144 = arith.mulf %143, %142 : vector<2x128xf32>
    %145 = math.tanh %144 : vector<2x128xf32>
    %cst_61 = arith.constant 1.000000e+00 : f32
    %146 = vector.broadcast %cst_61 : f32 to vector<2x128xf32>
    %147 = arith.addf %145, %146 : vector<2x128xf32>
    %cst_62 = arith.constant 5.000000e-01 : f32
    %148 = vector.broadcast %cst_62 : f32 to vector<2x128xf32>
    %149 = arith.mulf %148, %147 : vector<2x128xf32>
    %150 = arith.mulf %139, %114 : vector<2x128xf32>
    %151 = arith.mulf %131, %141 : vector<2x128xf32>
    %152 = arith.addf %150, %151 : vector<2x128xf32>
    %153 = math.tanh %152 : vector<2x128xf32>
    %154 = arith.mulf %149, %153 : vector<2x128xf32>
    %c3_63 = arith.constant 3 : index
    %c0_64 = arith.constant 0 : index
    %c0_65 = arith.constant 0 : index
    %155 = vector.load %arg5[%c3_63, %c0_64, %c0_65] : memref<8x2x128xf32, #tpu.memory_space<vmem>>, vector<1x2x128xf32>
    %156 = vector.shape_cast %155 : vector<1x2x128xf32> to vector<2x128xf32>
    %157 = vector.shape_cast %154 : vector<2x128xf32> to vector<1x2x128xf32>
    tpu.vector_store %arg5[%c3_63, %c0_64, %c0_65], %157 {strides = array<i32>} : memref<8x2x128xf32, #tpu.memory_space<vmem>>, vector<1x2x128xf32>,
    %c4 = arith.constant 4 : index
    %c0_66 = arith.constant 0 : index
    %c0_67 = arith.constant 0 : index
    %158 = vector.load %arg1[%c4, %c0_66, %c0_67] : memref<8x2x512xf32, #tpu.memory_space<vmem>>, vector<1x2x512xf32>
    %159 = vector.shape_cast %158 : vector<1x2x512xf32> to vector<2x512xf32>
    %cst_68 = arith.constant dense<0.000000e+00> : vector<2x512xf32>
    %160 = tpu.matmul %154, %3, %cst_68 {dimension_numbers = #tpu.dot_dimension_numbers<[1], [0], [0], [1], [0, 0, 1, 1], [], []>} : vector<2x128xf32>, vector<128x512xf32>, vector<2x512xf32> -> vector<2x512xf32>
    %161 = arith.addf %159, %160 : vector<2x512xf32>
    %162 = vector.extract_strided_slice %161 {offsets = [0, 0], sizes = [2, 128], strides = [1, 1]} : vector<2x512xf32> to vector<2x128xf32>
    %cst_69 = arith.constant 5.000000e-01 : f32
    %163 = vector.broadcast %cst_69 : f32 to vector<2x128xf32>
    %164 = arith.mulf %163, %162 : vector<2x128xf32>
    %165 = math.tanh %164 : vector<2x128xf32>
    %cst_70 = arith.constant 1.000000e+00 : f32
    %166 = vector.broadcast %cst_70 : f32 to vector<2x128xf32>
    %167 = arith.addf %165, %166 : vector<2x128xf32>
    %cst_71 = arith.constant 5.000000e-01 : f32
    %168 = vector.broadcast %cst_71 : f32 to vector<2x128xf32>
    %169 = arith.mulf %168, %167 : vector<2x128xf32>
    %170 = vector.extract_strided_slice %161 {offsets = [0, 128], sizes = [2, 128], strides = [1, 1]} : vector<2x512xf32> to vector<2x128xf32>
    %cst_72 = arith.constant 5.000000e-01 : f32
    %171 = vector.broadcast %cst_72 : f32 to vector<2x128xf32>
    %172 = arith.mulf %171, %170 : vector<2x128xf32>
    %173 = math.tanh %172 : vector<2x128xf32>
    %cst_73 = arith.constant 1.000000e+00 : f32
    %174 = vector.broadcast %cst_73 : f32 to vector<2x128xf32>
    %175 = arith.addf %173, %174 : vector<2x128xf32>
    %cst_74 = arith.constant 5.000000e-01 : f32
    %176 = vector.broadcast %cst_74 : f32 to vector<2x128xf32>
    %177 = arith.mulf %176, %175 : vector<2x128xf32>
    %178 = vector.extract_strided_slice %161 {offsets = [0, 256], sizes = [2, 128], strides = [1, 1]} : vector<2x512xf32> to vector<2x128xf32>
    %179 = math.tanh %178 : vector<2x128xf32>
    %180 = vector.extract_strided_slice %161 {offsets = [0, 384], sizes = [2, 128], strides = [1, 1]} : vector<2x512xf32> to vector<2x128xf32>
    %cst_75 = arith.constant 5.000000e-01 : f32
    %181 = vector.broadcast %cst_75 : f32 to vector<2x128xf32>
    %182 = arith.mulf %181, %180 : vector<2x128xf32>
    %183 = math.tanh %182 : vector<2x128xf32>
    %cst_76 = arith.constant 1.000000e+00 : f32
    %184 = vector.broadcast %cst_76 : f32 to vector<2x128xf32>
    %185 = arith.addf %183, %184 : vector<2x128xf32>
    %cst_77 = arith.constant 5.000000e-01 : f32
    %186 = vector.broadcast %cst_77 : f32 to vector<2x128xf32>
    %187 = arith.mulf %186, %185 : vector<2x128xf32>
    %188 = arith.mulf %177, %152 : vector<2x128xf32>
    %189 = arith.mulf %169, %179 : vector<2x128xf32>
    %190 = arith.addf %188, %189 : vector<2x128xf32>
    %191 = math.tanh %190 : vector<2x128xf32>
    %192 = arith.mulf %187, %191 : vector<2x128xf32>
    %c4_78 = arith.constant 4 : index
    %c0_79 = arith.constant 0 : index
    %c0_80 = arith.constant 0 : index
    %193 = vector.load %arg5[%c4_78, %c0_79, %c0_80] : memref<8x2x128xf32, #tpu.memory_space<vmem>>, vector<1x2x128xf32>
    %194 = vector.shape_cast %193 : vector<1x2x128xf32> to vector<2x128xf32>
    %195 = vector.shape_cast %192 : vector<2x128xf32> to vector<1x2x128xf32>
    tpu.vector_store %arg5[%c4_78, %c0_79, %c0_80], %195 {strides = array<i32>} : memref<8x2x128xf32, #tpu.memory_space<vmem>>, vector<1x2x128xf32>,
    %c5 = arith.constant 5 : index
    %c0_81 = arith.constant 0 : index
    %c0_82 = arith.constant 0 : index
    %196 = vector.load %arg1[%c5, %c0_81, %c0_82] : memref<8x2x512xf32, #tpu.memory_space<vmem>>, vector<1x2x512xf32>
    %197 = vector.shape_cast %196 : vector<1x2x512xf32> to vector<2x512xf32>
    %cst_83 = arith.constant dense<0.000000e+00> : vector<2x512xf32>
    %198 = tpu.matmul %192, %3, %cst_83 {dimension_numbers = #tpu.dot_dimension_numbers<[1], [0], [0], [1], [0, 0, 1, 1], [], []>} : vector<2x128xf32>, vector<128x512xf32>, vector<2x512xf32> -> vector<2x512xf32>
    %199 = arith.addf %197, %198 : vector<2x512xf32>
    %200 = vector.extract_strided_slice %199 {offsets = [0, 0], sizes = [2, 128], strides = [1, 1]} : vector<2x512xf32> to vector<2x128xf32>
    %cst_84 = arith.constant 5.000000e-01 : f32
    %201 = vector.broadcast %cst_84 : f32 to vector<2x128xf32>
    %202 = arith.mulf %201, %200 : vector<2x128xf32>
    %203 = math.tanh %202 : vector<2x128xf32>
    %cst_85 = arith.constant 1.000000e+00 : f32
    %204 = vector.broadcast %cst_85 : f32 to vector<2x128xf32>
    %205 = arith.addf %203, %204 : vector<2x128xf32>
    %cst_86 = arith.constant 5.000000e-01 : f32
    %206 = vector.broadcast %cst_86 : f32 to vector<2x128xf32>
    %207 = arith.mulf %206, %205 : vector<2x128xf32>
    %208 = vector.extract_strided_slice %199 {offsets = [0, 128], sizes = [2, 128], strides = [1, 1]} : vector<2x512xf32> to vector<2x128xf32>
    %cst_87 = arith.constant 5.000000e-01 : f32
    %209 = vector.broadcast %cst_87 : f32 to vector<2x128xf32>
    %210 = arith.mulf %209, %208 : vector<2x128xf32>
    %211 = math.tanh %210 : vector<2x128xf32>
    %cst_88 = arith.constant 1.000000e+00 : f32
    %212 = vector.broadcast %cst_88 : f32 to vector<2x128xf32>
    %213 = arith.addf %211, %212 : vector<2x128xf32>
    %cst_89 = arith.constant 5.000000e-01 : f32
    %214 = vector.broadcast %cst_89 : f32 to vector<2x128xf32>
    %215 = arith.mulf %214, %213 : vector<2x128xf32>
    %216 = vector.extract_strided_slice %199 {offsets = [0, 256], sizes = [2, 128], strides = [1, 1]} : vector<2x512xf32> to vector<2x128xf32>
    %217 = math.tanh %216 : vector<2x128xf32>
    %218 = vector.extract_strided_slice %199 {offsets = [0, 384], sizes = [2, 128], strides = [1, 1]} : vector<2x512xf32> to vector<2x128xf32>
    %cst_90 = arith.constant 5.000000e-01 : f32
    %219 = vector.broadcast %cst_90 : f32 to vector<2x128xf32>
    %220 = arith.mulf %219, %218 : vector<2x128xf32>
    %221 = math.tanh %220 : vector<2x128xf32>
    %cst_91 = arith.constant 1.000000e+00 : f32
    %222 = vector.broadcast %cst_91 : f32 to vector<2x128xf32>
    %223 = arith.addf %221, %222 : vector<2x128xf32>
    %cst_92 = arith.constant 5.000000e-01 : f32
    %224 = vector.broadcast %cst_92 : f32 to vector<2x128xf32>
    %225 = arith.mulf %224, %223 : vector<2x128xf32>
    %226 = arith.mulf %215, %190 : vector<2x128xf32>
    %227 = arith.mulf %207, %217 : vector<2x128xf32>
    %228 = arith.addf %226, %227 : vector<2x128xf32>
    %229 = math.tanh %228 : vector<2x128xf32>
    %230 = arith.mulf %225, %229 : vector<2x128xf32>
    %c5_93 = arith.constant 5 : index
    %c0_94 = arith.constant 0 : index
    %c0_95 = arith.constant 0 : index
    %231 = vector.load %arg5[%c5_93, %c0_94, %c0_95] : memref<8x2x128xf32, #tpu.memory_space<vmem>>, vector<1x2x128xf32>
    %232 = vector.shape_cast %231 : vector<1x2x128xf32> to vector<2x128xf32>
    %233 = vector.shape_cast %230 : vector<2x128xf32> to vector<1x2x128xf32>
    tpu.vector_store %arg5[%c5_93, %c0_94, %c0_95], %233 {strides = array<i32>} : memref<8x2x128xf32, #tpu.memory_space<vmem>>, vector<1x2x128xf32>,
    %c6 = arith.constant 6 : index
    %c0_96 = arith.constant 0 : index
    %c0_97 = arith.constant 0 : index
    %234 = vector.load %arg1[%c6, %c0_96, %c0_97] : memref<8x2x512xf32, #tpu.memory_space<vmem>>, vector<1x2x512xf32>
    %235 = vector.shape_cast %234 : vector<1x2x512xf32> to vector<2x512xf32>
    %cst_98 = arith.constant dense<0.000000e+00> : vector<2x512xf32>
    %236 = tpu.matmul %230, %3, %cst_98 {dimension_numbers = #tpu.dot_dimension_numbers<[1], [0], [0], [1], [0, 0, 1, 1], [], []>} : vector<2x128xf32>, vector<128x512xf32>, vector<2x512xf32> -> vector<2x512xf32>
    %237 = arith.addf %235, %236 : vector<2x512xf32>
    %238 = vector.extract_strided_slice %237 {offsets = [0, 0], sizes = [2, 128], strides = [1, 1]} : vector<2x512xf32> to vector<2x128xf32>
    %cst_99 = arith.constant 5.000000e-01 : f32
    %239 = vector.broadcast %cst_99 : f32 to vector<2x128xf32>
    %240 = arith.mulf %239, %238 : vector<2x128xf32>
    %241 = math.tanh %240 : vector<2x128xf32>
    %cst_100 = arith.constant 1.000000e+00 : f32
    %242 = vector.broadcast %cst_100 : f32 to vector<2x128xf32>
    %243 = arith.addf %241, %242 : vector<2x128xf32>
    %cst_101 = arith.constant 5.000000e-01 : f32
    %244 = vector.broadcast %cst_101 : f32 to vector<2x128xf32>
    %245 = arith.mulf %244, %243 : vector<2x128xf32>
    %246 = vector.extract_strided_slice %237 {offsets = [0, 128], sizes = [2, 128], strides = [1, 1]} : vector<2x512xf32> to vector<2x128xf32>
    %cst_102 = arith.constant 5.000000e-01 : f32
    %247 = vector.broadcast %cst_102 : f32 to vector<2x128xf32>
    %248 = arith.mulf %247, %246 : vector<2x128xf32>
    %249 = math.tanh %248 : vector<2x128xf32>
    %cst_103 = arith.constant 1.000000e+00 : f32
    %250 = vector.broadcast %cst_103 : f32 to vector<2x128xf32>
    %251 = arith.addf %249, %250 : vector<2x128xf32>
    %cst_104 = arith.constant 5.000000e-01 : f32
    %252 = vector.broadcast %cst_104 : f32 to vector<2x128xf32>
    %253 = arith.mulf %252, %251 : vector<2x128xf32>
    %254 = vector.extract_strided_slice %237 {offsets = [0, 256], sizes = [2, 128], strides = [1, 1]} : vector<2x512xf32> to vector<2x128xf32>
    %255 = math.tanh %254 : vector<2x128xf32>
    %256 = vector.extract_strided_slice %237 {offsets = [0, 384], sizes = [2, 128], strides = [1, 1]} : vector<2x512xf32> to vector<2x128xf32>
    %cst_105 = arith.constant 5.000000e-01 : f32
    %257 = vector.broadcast %cst_105 : f32 to vector<2x128xf32>
    %258 = arith.mulf %257, %256 : vector<2x128xf32>
    %259 = math.tanh %258 : vector<2x128xf32>
    %cst_106 = arith.constant 1.000000e+00 : f32
    %260 = vector.broadcast %cst_106 : f32 to vector<2x128xf32>
    %261 = arith.addf %259, %260 : vector<2x128xf32>
    %cst_107 = arith.constant 5.000000e-01 : f32
    %262 = vector.broadcast %cst_107 : f32 to vector<2x128xf32>
    %263 = arith.mulf %262, %261 : vector<2x128xf32>
    %264 = arith.mulf %253, %228 : vector<2x128xf32>
    %265 = arith.mulf %245, %255 : vector<2x128xf32>
    %266 = arith.addf %264, %265 : vector<2x128xf32>
    %267 = math.tanh %266 : vector<2x128xf32>
    %268 = arith.mulf %263, %267 : vector<2x128xf32>
    %c6_108 = arith.constant 6 : index
    %c0_109 = arith.constant 0 : index
    %c0_110 = arith.constant 0 : index
    %269 = vector.load %arg5[%c6_108, %c0_109, %c0_110] : memref<8x2x128xf32, #tpu.memory_space<vmem>>, vector<1x2x128xf32>
    %270 = vector.shape_cast %269 : vector<1x2x128xf32> to vector<2x128xf32>
    %271 = vector.shape_cast %268 : vector<2x128xf32> to vector<1x2x128xf32>
    tpu.vector_store %arg5[%c6_108, %c0_109, %c0_110], %271 {strides = array<i32>} : memref<8x2x128xf32, #tpu.memory_space<vmem>>, vector<1x2x128xf32>,
    %c7 = arith.constant 7 : index
    %c0_111 = arith.constant 0 : index
    %c0_112 = arith.constant 0 : index
    %272 = vector.load %arg1[%c7, %c0_111, %c0_112] : memref<8x2x512xf32, #tpu.memory_space<vmem>>, vector<1x2x512xf32>
    %273 = vector.shape_cast %272 : vector<1x2x512xf32> to vector<2x512xf32>
    %cst_113 = arith.constant dense<0.000000e+00> : vector<2x512xf32>
    %274 = tpu.matmul %268, %3, %cst_113 {dimension_numbers = #tpu.dot_dimension_numbers<[1], [0], [0], [1], [0, 0, 1, 1], [], []>} : vector<2x128xf32>, vector<128x512xf32>, vector<2x512xf32> -> vector<2x512xf32>
    %275 = arith.addf %273, %274 : vector<2x512xf32>
    %276 = vector.extract_strided_slice %275 {offsets = [0, 0], sizes = [2, 128], strides = [1, 1]} : vector<2x512xf32> to vector<2x128xf32>
    %cst_114 = arith.constant 5.000000e-01 : f32
    %277 = vector.broadcast %cst_114 : f32 to vector<2x128xf32>
    %278 = arith.mulf %277, %276 : vector<2x128xf32>
    %279 = math.tanh %278 : vector<2x128xf32>
    %cst_115 = arith.constant 1.000000e+00 : f32
    %280 = vector.broadcast %cst_115 : f32 to vector<2x128xf32>
    %281 = arith.addf %279, %280 : vector<2x128xf32>
    %cst_116 = arith.constant 5.000000e-01 : f32
    %282 = vector.broadcast %cst_116 : f32 to vector<2x128xf32>
    %283 = arith.mulf %282, %281 : vector<2x128xf32>
    %284 = vector.extract_strided_slice %275 {offsets = [0, 128], sizes = [2, 128], strides = [1, 1]} : vector<2x512xf32> to vector<2x128xf32>
    %cst_117 = arith.constant 5.000000e-01 : f32
    %285 = vector.broadcast %cst_117 : f32 to vector<2x128xf32>
    %286 = arith.mulf %285, %284 : vector<2x128xf32>
    %287 = math.tanh %286 : vector<2x128xf32>
    %cst_118 = arith.constant 1.000000e+00 : f32
    %288 = vector.broadcast %cst_118 : f32 to vector<2x128xf32>
    %289 = arith.addf %287, %288 : vector<2x128xf32>
    %cst_119 = arith.constant 5.000000e-01 : f32
    %290 = vector.broadcast %cst_119 : f32 to vector<2x128xf32>
    %291 = arith.mulf %290, %289 : vector<2x128xf32>
    %292 = vector.extract_strided_slice %275 {offsets = [0, 256], sizes = [2, 128], strides = [1, 1]} : vector<2x512xf32> to vector<2x128xf32>
    %293 = math.tanh %292 : vector<2x128xf32>
    %294 = vector.extract_strided_slice %275 {offsets = [0, 384], sizes = [2, 128], strides = [1, 1]} : vector<2x512xf32> to vector<2x128xf32>
    %cst_120 = arith.constant 5.000000e-01 : f32
    %295 = vector.broadcast %cst_120 : f32 to vector<2x128xf32>
    %296 = arith.mulf %295, %294 : vector<2x128xf32>
    %297 = math.tanh %296 : vector<2x128xf32>
    %cst_121 = arith.constant 1.000000e+00 : f32
    %298 = vector.broadcast %cst_121 : f32 to vector<2x128xf32>
    %299 = arith.addf %297, %298 : vector<2x128xf32>
    %cst_122 = arith.constant 5.000000e-01 : f32
    %300 = vector.broadcast %cst_122 : f32 to vector<2x128xf32>
    %301 = arith.mulf %300, %299 : vector<2x128xf32>
    %302 = arith.mulf %291, %266 : vector<2x128xf32>
    %303 = arith.mulf %283, %293 : vector<2x128xf32>
    %304 = arith.addf %302, %303 : vector<2x128xf32>
    %305 = math.tanh %304 : vector<2x128xf32>
    %306 = arith.mulf %301, %305 : vector<2x128xf32>
    %c7_123 = arith.constant 7 : index
    %c0_124 = arith.constant 0 : index
    %c0_125 = arith.constant 0 : index
    %307 = vector.load %arg5[%c7_123, %c0_124, %c0_125] : memref<8x2x128xf32, #tpu.memory_space<vmem>>, vector<1x2x128xf32>
    %308 = vector.shape_cast %307 : vector<1x2x128xf32> to vector<2x128xf32>
    %309 = vector.shape_cast %306 : vector<2x128xf32> to vector<1x2x128xf32>
    tpu.vector_store %arg5[%c7_123, %c0_124, %c0_125], %309 {strides = array<i32>} : memref<8x2x128xf32, #tpu.memory_space<vmem>>, vector<1x2x128xf32>,
    %c0_126 = arith.constant 0 : index
    %c0_127 = arith.constant 0 : index
    %310 = vector.load %arg8[%c0_126, %c0_127] : memref<2x128xf32, #tpu.memory_space<vmem>>, vector<2x128xf32>
    tpu.vector_store %arg8[%c0_126, %c0_127], %306 {strides = array<i32>} : memref<2x128xf32, #tpu.memory_space<vmem>>, vector<2x128xf32>,
    %c0_128 = arith.constant 0 : index
    %c0_129 = arith.constant 0 : index
    %311 = vector.load %arg9[%c0_128, %c0_129] : memref<2x128xf32, #tpu.memory_space<vmem>>, vector<2x128xf32>
    tpu.vector_store %arg9[%c0_128, %c0_129], %304 {strides = array<i32>} : memref<2x128xf32, #tpu.memory_space<vmem>>, vector<2x128xf32>,
    %c0_i32_130 = arith.constant 0 : i32
    %312 = arith.cmpi eq, %arg0, %c0_i32_130 : i32
    %313 = arith.extui %312 : i1 to i32
    %c0_i32_131 = arith.constant 0 : i32
    %314 = arith.cmpi ne, %313, %c0_i32_131 : i32
    scf.if %314 {
      %c0_132 = arith.constant 0 : index
      %c0_133 = arith.constant 0 : index
      %315 = vector.load %arg6[%c0_132, %c0_133] : memref<2x128xf32, #tpu.memory_space<vmem>>, vector<2x128xf32>
      tpu.vector_store %arg6[%c0_132, %c0_133], %306 {strides = array<i32>} : memref<2x128xf32, #tpu.memory_space<vmem>>, vector<2x128xf32>,
      %c0_134 = arith.constant 0 : index
      %c0_135 = arith.constant 0 : index
      %316 = vector.load %arg7[%c0_134, %c0_135] : memref<2x128xf32, #tpu.memory_space<vmem>>, vector<2x128xf32>
      tpu.vector_store %arg7[%c0_134, %c0_135], %304 {strides = array<i32>} : memref<2x128xf32, #tpu.memory_space<vmem>>, vector<2x128xf32>,
    } else {
    }
    return
  }
  func.func @transform_0(%arg0: i32) -> (i32, i32, i32) {
    %c0_i32 = arith.constant 0 : i32
    %c0_i32_0 = arith.constant 0 : i32
    %c0_i32_1 = arith.constant 0 : i32
    return %arg0, %c0_i32, %c0_i32_0 : i32, i32, i32
  }
  func.func @transform_1(%arg0: i32) -> (i32, i32) {
    %c0_i32 = arith.constant 0 : i32
    %c0_i32_0 = arith.constant 0 : i32
    %c0_i32_1 = arith.constant 0 : i32
    return %c0_i32, %c0_i32_0 : i32, i32
  }
  func.func @transform_2(%arg0: i32) -> (i32, i32) {
    %c0_i32 = arith.constant 0 : i32
    %c0_i32_0 = arith.constant 0 : i32
    %c0_i32_1 = arith.constant 0 : i32
    return %c0_i32, %c0_i32_0 : i32, i32
  }
  func.func @transform_3(%arg0: i32) -> (i32, i32) {
    %c0_i32 = arith.constant 0 : i32
    %c0_i32_0 = arith.constant 0 : i32
    %c0_i32_1 = arith.constant 0 : i32
    return %c0_i32, %c0_i32_0 : i32, i32
  }
  func.func @transform_4(%arg0: i32) -> (i32, i32, i32) {
    %c0_i32 = arith.constant 0 : i32
    %c0_i32_0 = arith.constant 0 : i32
    %c0_i32_1 = arith.constant 0 : i32
    return %arg0, %c0_i32, %c0_i32_0 : i32, i32, i32
  }
  func.func @transform_5(%arg0: i32) -> (i32, i32) {
    %c0_i32 = arith.constant 0 : i32
    %c0_i32_0 = arith.constant 0 : i32
    %c0_i32_1 = arith.constant 0 : i32
    return %c0_i32, %c0_i32_0 : i32, i32
  }
  func.func @transform_6(%arg0: i32) -> (i32, i32) {
    %c0_i32 = arith.constant 0 : i32
    %c0_i32_0 = arith.constant 0 : i32
    %c0_i32_1 = arith.constant 0 : i32
    return %c0_i32, %c0_i32_0 : i32, i32
  }
}

</mosaic_0001>

<llo_original>
// kernel: tpu_custom_call.1
$region0: #{tpu_custom_call.1}
  #allocation0 [shape = 'u32[]', space=smem, size = 0x4, offset = 0x4, fixed_abs, tag = 'smem constant byte address 0x4 - core index']
  #allocation1 [shape = 'u32[144,128]{1,0:T(1,128)}', space=vmem, size = 0x12000, scoped, tag = 'internal scratch']
  #allocation2 [shape = 'f32[2,128]{1,0:T(2,128)}', space=vmem, size = 0x400, scoped, tag = 'scratch operand']
  #allocation3 [shape = 'f32[2,128]{1,0:T(2,128)}', space=vmem, size = 0x400, scoped, tag = 'scratch operand']
  %s0 = inlined_call_operand.hbm [shape: f32[8,2,512], index: 0, kind: input, shape index: {}]
  %s1 = inlined_call_operand.hbm [shape: f32[2,128], index: 1, kind: input, shape index: {}]
  %s2 = inlined_call_operand.vmem [shape: f32[2,128], index: 2, kind: input, shape index: {}]
  %s3 = inlined_call_operand.hbm [shape: f32[128,512], index: 3, kind: input, shape index: {}]
  %s4 = inlined_call_operand.hbm [shape: f32[8,2,128], index: 4, kind: output, shape index: {0}]
  %s5 = inlined_call_operand.hbm [shape: f32[2,128], index: 5, kind: output, shape index: {1}]
  %s6 = inlined_call_operand.hbm [shape: f32[2,128], index: 6, kind: output, shape index: {2}]
  %7 = xla_tuple %s4, %s5, %s6
  %s8 = sld [smem:[#allocation0]]
  $region62: #{tpu_custom_call.1} parent=0
    _
  %s10 = ssub.s32 1, %s8
  %s11 = scalar_select 0, %s10, %s8
  $region1: #{tpu_custom_call.1} parent=0
    #allocation4 [shape = 'u8[32768]{0}', space=vmem, size = 0x8000, scoped, tag = 'input window, operand 0, single buffered']
    #allocation5 [shape = 's32[1]{0}', space=sflag, size = 0x4, scoped, tag = 'scoped memory for tpu_custom_call.1']
    #allocation6 [shape = 's32[1]{0}', space=sflag, size = 0x4, scoped, tag = 'scoped memory for tpu_custom_call.1']
    #allocation7 [shape = 'u8[1024]{0}', space=vmem, size = 0x400, scoped, tag = 'input window, operand 1, single buffered']
    #allocation8 [shape = 's32[1]{0}', space=sflag, size = 0x4, scoped, tag = 'scoped memory for tpu_custom_call.1']
    #allocation9 [shape = 'u8[262144]{0}', space=vmem, size = 0x40000, scoped, tag = 'input window, operand 3, single buffered']
    #allocation10 [shape = 'u8[8192]{0}', space=vmem, size = 0x2000, scoped, tag = 'output window, operand 0, single buffered']
    #allocation11 [shape = 'u8[1024]{0}', space=vmem, size = 0x400, scoped, tag = 'output window, operand 1, single buffered']
    #allocation12 [shape = 's32[1]{0}', space=sflag, size = 0x4, scoped, tag = 'scoped memory for tpu_custom_call.1']
    #allocation13 [shape = 'u8[1024]{0}', space=vmem, size = 0x400, scoped, tag = 'output window, operand 2, single buffered']
    %12 = vsyncpa [#allocation5], 0
    %13 = vsyncpa [#allocation8], 0
    %14 = vsyncpa [#allocation6], 0
    %15 = vsyncpa [#allocation12], 0
    // Predicated region
    $region2: #{tpu_custom_call.1} parent=1 // pred_check
      _
    $region3: #{tpu_custom_call.1} parent=1 // pred_check_branch
      %17 = sbr.rel (0) target = $region5
    $region4: #{tpu_custom_call.1} parent=1 // pred_region
      %s19 = ssub.s32 1024, 1024
      %20 = vsyncadd [#allocation5], %s19
      %s21 = sshll.u32 [#allocation4], 4
      %s22 = int_to_ptr.vmem [resolvable:$true] %s21
      %27 = dma.hbm_to_vmem [thread:$0]  %s0, 1024, %s22, [#allocation5], 128, 128, 8
    $region5: #{tpu_custom_call.1} parent=1 // pred_fallthru
      _
    // Predicated region
    $region6: #{tpu_custom_call.1} parent=1 // pred_check
      _
    $region7: #{tpu_custom_call.1} parent=1 // pred_check_branch
      %29 = sbr.rel (0) target = $region9
    $region8: #{tpu_custom_call.1} parent=1 // pred_region
      %s31 = ssub.s32 32, 32
      %32 = vsyncadd [#allocation8], %s31
      %s34 = sshll.u32 [#allocation7], 4
      %s35 = int_to_ptr.vmem [resolvable:$true] %s34
      %37 = dma.hbm_to_vmem [thread:$0]  %s1, 32, %s35, [#allocation8]
    $region9: #{tpu_custom_call.1} parent=1 // pred_fallthru
      _
    // Predicated region
    $region10: #{tpu_custom_call.1} parent=1 // pred_check
      _
    $region11: #{tpu_custom_call.1} parent=1 // pred_check_branch
      %39 = sbr.rel (0) target = $region13
    $region12: #{tpu_custom_call.1} parent=1 // pred_region
      _
    $region13: #{tpu_custom_call.1} parent=1 // pred_fallthru
      _
    // Predicated region
    $region14: #{tpu_custom_call.1} parent=1 // pred_check
      _
    $region15: #{tpu_custom_call.1} parent=1 // pred_check_branch
      %41 = sbr.rel (0) target = $region17
    $region16: #{tpu_custom_call.1} parent=1 // pred_region
      %s43 = ssub.s32 8192, 8192
      %44 = vsyncadd [#allocation8], %s43
      %s45 = sshll.u32 [#allocation9], 4
      %s46 = int_to_ptr.vmem [resolvable:$true] %s45
      %51 = dma.hbm_to_vmem [thread:$0]  %s3, 8192, %s46, [#allocation8], 512, 512, 32
    $region17: #{tpu_custom_call.1} parent=1 // pred_fallthru
      _
    // Predicated region
    $region18: #{tpu_custom_call.1} parent=1 // pred_check
      _
    $region19: #{tpu_custom_call.1} parent=1 // pred_check_branch
      %53 = sbr.rel (0) target = $region21
    $region20: #{tpu_custom_call.1} parent=1 // pred_region
      %54 = dma.done [#allocation5], 1024
    $region21: #{tpu_custom_call.1} parent=1 // pred_fallthru
      _
    // Predicated region
    $region22: #{tpu_custom_call.1} parent=1 // pred_check
      _
    $region23: #{tpu_custom_call.1} parent=1 // pred_check_branch
      %56 = sbr.rel (0) target = $region25
    $region24: #{tpu_custom_call.1} parent=1 // pred_region
      %57 = dma.done [#allocation8], 32
    $region25: #{tpu_custom_call.1} parent=1 // pred_fallthru
      _
    // Predicated region
    $region26: #{tpu_custom_call.1} parent=1 // pred_check
      _
    $region27: #{tpu_custom_call.1} parent=1 // pred_check_branch
      %59 = sbr.rel (0) target = $region29
    $region28: #{tpu_custom_call.1} parent=1 // pred_region
      %60 = dma.done [#allocation8], 8192
    $region29: #{tpu_custom_call.1} parent=1 // pred_fallthru
      _
    %p61 = scmp.eq.s32.totalorder 0, 0
    // Predicated region
    $region30: #{tpu_custom_call.1} parent=1 // pred_check
      %p62 = pneg %p61
    $region31: #{tpu_custom_call.1} parent=1 // pred_check_branch
      %64 = sbr.rel (%p62) target = $region33
    $region32: #{tpu_custom_call.1} parent=1 // pred_region
      %v65 = vld [vmem:[#allocation7] sm:$0x3]
      %66 = vst [vmem:[#allocation2] sm:$0x3] %v65
      %v67 = vld [vmem:[%s2] sm:$0x3]
      %68 = vst [vmem:[#allocation3] sm:$0x3] %v67
    $region33: #{tpu_custom_call.1} parent=1 // pred_fallthru
      _
    %v69 = vld [vmem:[#allocation9] sm:$0xff]
    %v70 = vld [vmem:[#allocation9 + $0x8] sm:$0xff]
    %v71 = vld [vmem:[#allocation9 + $0x10] sm:$0xff]
    %v72 = vld [vmem:[#allocation9 + $0x18] sm:$0xff]
    %v73 = vld [vmem:[#allocation9 + $0x20] sm:$0xff]
    %v74 = vld [vmem:[#allocation9 + $0x28] sm:$0xff]
    %v75 = vld [vmem:[#allocation9 + $0x30] sm:$0xff]
    %v76 = vld [vmem:[#allocation9 + $0x38] sm:$0xff]
    %v77 = vld [vmem:[#allocation9 + $0x40] sm:$0xff]
    %v78 = vld [vmem:[#allocation9 + $0x48] sm:$0xff]
    %v79 = vld [vmem:[#allocation9 + $0x50] sm:$0xff]
    %v80 = vld [vmem:[#allocation9 + $0x58] sm:$0xff]
    %v81 = vld [vmem:[#allocation9 + $0x60] sm:$0xff]
    %v82 = vld [vmem:[#allocation9 + $0x68] sm:$0xff]
    %v83 = vld [vmem:[#allocation9 + $0x70] sm:$0xff]
    %v84 = vld [vmem:[#allocation9 + $0x78] sm:$0xff]
    %v85 = vld [vmem:[#allocation9 + $0x80] sm:$0xff]
    %v86 = vld [vmem:[#allocation9 + $0x88] sm:$0xff]
    %v87 = vld [vmem:[#allocation9 + $0x90] sm:$0xff]
    %v88 = vld [vmem:[#allocation9 + $0x98] sm:$0xff]
    %v89 = vld [vmem:[#allocation9 + $0xa0] sm:$0xff]
    %v90 = vld [vmem:[#allocation9 + $0xa8] sm:$0xff]
    %v91 = vld [vmem:[#allocation9 + $0xb0] sm:$0xff]
    %v92 = vld [vmem:[#allocation9 + $0xb8] sm:$0xff]
    %v93 = vld [vmem:[#allocation9 + $0xc0] sm:$0xff]
    %v94 = vld [vmem:[#allocation9 + $0xc8] sm:$0xff]
    %v95 = vld [vmem:[#allocation9 + $0xd0] sm:$0xff]
    %v96 = vld [vmem:[#allocation9 + $0xd8] sm:$0xff]
    %v97 = vld [vmem:[#allocation9 + $0xe0] sm:$0xff]
    %v98 = vld [vmem:[#allocation9 + $0xe8] sm:$0xff]
    %v99 = vld [vmem:[#allocation9 + $0xf0] sm:$0xff]
    %v100 = vld [vmem:[#allocation9 + $0xf8] sm:$0xff]
    %v101 = vld [vmem:[#allocation9 + $0x100] sm:$0xff]
    %v102 = vld [vmem:[#allocation9 + $0x108] sm:$0xff]
    %v103 = vld [vmem:[#allocation9 + $0x110] sm:$0xff]
    %v104 = vld [vmem:[#allocation9 + $0x118] sm:$0xff]
    %v105 = vld [vmem:[#allocation9 + $0x120] sm:$0xff]
    %v106 = vld [vmem:[#allocation9 + $0x128] sm:$0xff]
    %v107 = vld [vmem:[#allocation9 + $0x130] sm:$0xff]
    %v108 = vld [vmem:[#allocation9 + $0x138] sm:$0xff]
    %v109 = vld [vmem:[#allocation9 + $0x140] sm:$0xff]
    %v110 = vld [vmem:[#allocation9 + $0x148] sm:$0xff]
    %v111 = vld [vmem:[#allocation9 + $0x150] sm:$0xff]
    %v112 = vld [vmem:[#allocation9 + $0x158] sm:$0xff]
    %v113 = vld [vmem:[#allocation9 + $0x160] sm:$0xff]
    %v114 = vld [vmem:[#allocation9 + $0x168] sm:$0xff]
    %v115 = vld [vmem:[#allocation9 + $0x170] sm:$0xff]
    %v116 = vld [vmem:[#allocation9 + $0x178] sm:$0xff]
    %v117 = vld [vmem:[#allocation9 + $0x180] sm:$0xff]
    %v118 = vld [vmem:[#allocation9 + $0x188] sm:$0xff]
    %v119 = vld [vmem:[#allocation9 + $0x190] sm:$0xff]
    %v120 = vld [vmem:[#allocation9 + $0x198] sm:$0xff]
    %v121 = vld [vmem:[#allocation9 + $0x1a0] sm:$0xff]
    %v122 = vld [vmem:[#allocation9 + $0x1a8] sm:$0xff]
    %v123 = vld [vmem:[#allocation9 + $0x1b0] sm:$0xff]
    %v124 = vld [vmem:[#allocation9 + $0x1b8] sm:$0xff]
    %v125 = vld [vmem:[#allocation9 + $0x1c0] sm:$0xff]
    %v126 = vld [vmem:[#allocation9 + $0x1c8] sm:$0xff]
    %v127 = vld [vmem:[#allocation9 + $0x1d0] sm:$0xff]
    %v128 = vld [vmem:[#allocation9 + $0x1d8] sm:$0xff]
    %v129 = vld [vmem:[#allocation9 + $0x1e0] sm:$0xff]
    %v130 = vld [vmem:[#allocation9 + $0x1e8] sm:$0xff]
    %v131 = vld [vmem:[#allocation9 + $0x1f0] sm:$0xff]
    %v132 = vld [vmem:[#allocation9 + $0x1f8] sm:$0xff]
    %v133 = vld [vmem:[#allocation2] sm:$0x3]
    %v134 = vld [vmem:[#allocation3] sm:$0x3]
    %v135 = vld [vmem:[#allocation4] sm:$0xff]
    %136 = vmatprep.subr.mxu0 %v130
    %137 = vmatpush1.msra.mxu0 %v129
    %138 = vmatprep.subr.mxu0 %v126
    %139 = vmatpush1.msra.mxu0 %v125
    %140 = vmatprep.subr.mxu0 %v122
    %141 = vmatpush1.msra.mxu0 %v121
    %142 = vmatprep.subr.mxu0 %v118
    %143 = vmatpush1.msra.mxu0 %v117
    %144 = vmatprep.subr.mxu0 %v114
    %145 = vmatpush1.msra.mxu0 %v113
    %146 = vmatprep.subr.mxu0 %v110
    %147 = vmatpush1.msra.mxu0 %v109
    %148 = vmatprep.subr.mxu0 %v106
    %149 = vmatpush1.msra.mxu0 %v105
    %150 = vmatprep.subr.mxu0 %v102
    %151 = vmatpush1.msra.mxu0 %v101
    %152 = vmatprep.subr.mxu0 %v98
    %153 = vmatpush1.msra.mxu0 %v97
    %154 = vmatprep.subr.mxu0 %v94
    %155 = vmatpush1.msra.mxu0 %v93
    %156 = vmatprep.subr.mxu0 %v90
    %157 = vmatpush1.msra.mxu0 %v89
    %158 = vmatprep.subr.mxu0 %v86
    %159 = vmatpush1.msra.mxu0 %v85
    %160 = vmatprep.subr.mxu0 %v82
    %161 = vmatpush1.msra.mxu0 %v81
    %162 = vmatprep.subr.mxu0 %v78
    %163 = vmatpush1.msra.mxu0 %v77
    %164 = vmatprep.subr.mxu0 %v74
    %165 = vmatpush1.msra.mxu0 %v73
    %166 = vmatprep.subr.mxu0 %v70
    %167 = vmatpush1.msra.mxu0 %v69
    %168 = vmatprep.subr.mxu0 0.0
    %169 = vmatpush2.msra.mxu0 0.0
    %170 = vmatprep.subr.mxu0 0.0
    %171 = vmatpush2.msra.mxu0 0.0
    %172 = vmatprep.subr.mxu0 0.0
    %173 = vmatpush2.msra.mxu0 0.0
    %174 = vmatprep.subr.mxu0 0.0
    %175 = vmatpush2.msra.mxu0 0.0
    %176 = vmatprep.subr.mxu0 0.0
    %177 = vmatpush2.msra.mxu0 0.0
    %178 = vmatprep.subr.mxu0 0.0
    %179 = vmatpush2.msra.mxu0 0.0
    %180 = vmatprep.subr.mxu0 0.0
    %181 = vmatpush2.msra.mxu0 0.0
    %182 = vmatprep.subr.mxu0 0.0
    %183 = vmatpush2.msra.mxu0 0.0
    %184 = vmatprep.subr.mxu0 0.0
    %185 = vmatpush2.msra.mxu0 0.0
    %186 = vmatprep.subr.mxu0 0.0
    %187 = vmatpush2.msra.mxu0 0.0
    %188 = vmatprep.subr.mxu0 0.0
    %189 = vmatpush2.msra.mxu0 0.0
    %190 = vmatprep.subr.mxu0 0.0
    %191 = vmatpush2.msra.mxu0 0.0
    %192 = vmatprep.subr.mxu0 0.0
    %193 = vmatpush2.msra.mxu0 0.0
    %194 = vmatprep.subr.mxu0 0.0
    %195 = vmatpush2.msra.mxu0 0.0
    %196 = vmatprep.subr.mxu0 0.0
    %197 = vmatpush2.msra.mxu0 0.0
    %198 = vmatprep.subr.mxu0 0.0
    %199 = vmatpush2.msra.mxu0 0.0
    %200 = vmatprep.mubr.f32.mxu0 0.0
    %201 = vmatmul.mubr.f32.gmra.mxu0 %v133
    %v202 = vpop.f32.mrf.mxu0
    %v203 = vadd.f32 0.0, %v202
    %v204 = vpop.f32.mrf.mxu0
    %v205 = vadd.f32 0.0, %v204
    %206 = vdwg.mxu0
    %207 = vmatprep.subr.mxu0 %v132
    %208 = vmatpush1.msra.mxu0 %v131
    %209 = vmatprep.subr.mxu0 %v128
    %210 = vmatpush1.msra.mxu0 %v127
    %211 = vmatprep.subr.mxu0 %v124
    %212 = vmatpush1.msra.mxu0 %v123
    %213 = vmatprep.subr.mxu0 %v120
    %214 = vmatpush1.msra.mxu0 %v119
    %215 = vmatprep.subr.mxu0 %v116
    %216 = vmatpush1.msra.mxu0 %v115
    %217 = vmatprep.subr.mxu0 %v112
    %218 = vmatpush1.msra.mxu0 %v111
    %219 = vmatprep.subr.mxu0 %v108
    %220 = vmatpush1.msra.mxu0 %v107
    %221 = vmatprep.subr.mxu0 %v104
    %222 = vmatpush1.msra.mxu0 %v103
    %223 = vmatprep.subr.mxu0 %v100
    %224 = vmatpush1.msra.mxu0 %v99
    %225 = vmatprep.subr.mxu0 %v96
    %226 = vmatpush1.msra.mxu0 %v95
    %227 = vmatprep.subr.mxu0 %v92
    %228 = vmatpush1.msra.mxu0 %v91
    %229 = vmatprep.subr.mxu0 %v88
    %230 = vmatpush1.msra.mxu0 %v87
    %231 = vmatprep.subr.mxu0 %v84
    %232 = vmatpush1.msra.mxu0 %v83
    %233 = vmatprep.subr.mxu0 %v80
    %234 = vmatpush1.msra.mxu0 %v79
    %235 = vmatprep.subr.mxu0 %v76
    %236 = vmatpush1.msra.mxu0 %v75
    %237 = vmatprep.subr.mxu0 %v72
    %238 = vmatpush1.msra.mxu0 %v71
    %239 = vmatprep.subr.mxu0 0.0
    %240 = vmatpush2.msra.mxu0 0.0
    %241 = vmatprep.subr.mxu0 0.0
    %242 = vmatpush2.msra.mxu0 0.0
    %243 = vmatprep.subr.mxu0 0.0
    %244 = vmatpush2.msra.mxu0 0.0
    %245 = vmatprep.subr.mxu0 0.0
    %246 = vmatpush2.msra.mxu0 0.0
    %247 = vmatprep.subr.mxu0 0.0
    %248 = vmatpush2.msra.mxu0 0.0
    %249 = vmatprep.subr.mxu0 0.0
    %250 = vmatpush2.msra.mxu0 0.0
    %251 = vmatprep.subr.mxu0 0.0
    %252 = vmatpush2.msra.mxu0 0.0
    %253 = vmatprep.subr.mxu0 0.0
    %254 = vmatpush2.msra.mxu0 0.0
    %255 = vmatprep.subr.mxu0 0.0
    %256 = vmatpush2.msra.mxu0 0.0
    %257 = vmatprep.subr.mxu0 0.0
    %258 = vmatpush2.msra.mxu0 0.0
    %259 = vmatprep.subr.mxu0 0.0
    %260 = vmatpush2.msra.mxu0 0.0
    %261 = vmatprep.subr.mxu0 0.0
    %262 = vmatpush2.msra.mxu0 0.0
    %263 = vmatprep.subr.mxu0 0.0
    %264 = vmatpush2.msra.mxu0 0.0
    %265 = vmatprep.subr.mxu0 0.0
    %266 = vmatpush2.msra.mxu0 0.0
    %267 = vmatprep.subr.mxu0 0.0
    %268 = vmatpush2.msra.mxu0 0.0
    %269 = vmatprep.subr.mxu0 0.0
    %270 = vmatpush2.msra.mxu0 0.0
    %271 = vmatprep.mubr.f32.mxu0 0.0
    %272 = vmatmul.mubr.f32.gmra.mxu0 %v133
    %v273 = vpop.f32.mrf.mxu0
    %v274 = vadd.f32 0.0, %v273
    %v275 = vpop.f32.mrf.mxu0
    %v276 = vadd.f32 0.0, %v275
    %277 = vdwg.mxu0
    %v282 = vcombine.low %v203, %v205
    %v283 = vcombine.low %v274, %v276
    %v285 = vunpack.c.l.s4 1983009808
    %v286 = vunpack.c.0.s8 %v285
    %v287 = vlaneseq
    %v288 = vshrl.u32 %v287, 7
    %v289 = vsub.s32 %v286, %v288
    %v290 = vrot.slane %v282, %v289
    %v292 = vunpack.c.l.s4 1983009808
    %v293 = vunpack.c.0.s8 %v292
    %v294 = vlaneseq
    %v295 = vshrl.u32 %v294, 7
    %v296 = vsub.s32 %v293, %v295
    %v297 = vrot.slane %v283, %v296
    %v298 = vcombine.low %v290, %v297
    %v300 = vadd.f32 %v135, %v298
    %v301 = vmul.f32 %v300, 0.5
    %v302 = vtanh.pop %v301
    %v303 = vadd.f32 %v302, 1.0
    %v304 = vmul.f32 %v303, 0.5
    %v306 = vrot.slane %v300, 2
    %v308 = vmul.f32 %v306, 0.5
    %v309 = vtanh.pop %v308
    %v310 = vadd.f32 %v309, 1.0
    %v311 = vmul.f32 %v310, 0.5
    %v312 = vrot.slane %v300, 4
    %v314 = vtanh.pop %v312
    %v315 = vrot.slane %v300, 6
    %v317 = vmul.f32 %v315, 0.5
    %v318 = vtanh.pop %v317
    %v319 = vadd.f32 %v318, 1.0
    %v320 = vmul.f32 %v319, 0.5
    %v321 = vmul.f32 %v311, %v134
    %v322 = vmul.f32 %v304, %v314
    %v323 = vadd.f32 %v321, %v322
    %v324 = vtanh.pop %v323
    %v325 = vmul.f32 %v320, %v324
    %326 = vst [vmem:[#allocation10] sm:$0x3] %v325
    %s327 = scalar_lea.vmem [#allocation4], 8
    %v328 = vld [vmem:[%s327] sm:$0xff]
    %329 = vmatprep.subr.mxu0 %v130
    %330 = vmatpush1.msra.mxu0 %v129
    %331 = vmatprep.subr.mxu0 %v126
    %332 = vmatpush1.msra.mxu0 %v125
    %333 = vmatprep.subr.mxu0 %v122
    %334 = vmatpush1.msra.mxu0 %v121
    %335 = vmatprep.subr.mxu0 %v118
    %336 = vmatpush1.msra.mxu0 %v117
    %337 = vmatprep.subr.mxu0 %v114
    %338 = vmatpush1.msra.mxu0 %v113
    %339 = vmatprep.subr.mxu0 %v110
    %340 = vmatpush1.msra.mxu0 %v109
    %341 = vmatprep.subr.mxu0 %v106
    %342 = vmatpush1.msra.mxu0 %v105
    %343 = vmatprep.subr.mxu0 %v102
    %344 = vmatpush1.msra.mxu0 %v101
    %345 = vmatprep.subr.mxu0 %v98
    %346 = vmatpush1.msra.mxu0 %v97
    %347 = vmatprep.subr.mxu0 %v94
    %348 = vmatpush1.msra.mxu0 %v93
    %349 = vmatprep.subr.mxu0 %v90
    %350 = vmatpush1.msra.mxu0 %v89
    %351 = vmatprep.subr.mxu0 %v86
    %352 = vmatpush1.msra.mxu0 %v85
    %353 = vmatprep.subr.mxu0 %v82
    %354 = vmatpush1.msra.mxu0 %v81
    %355 = vmatprep.subr.mxu0 %v78
    %356 = vmatpush1.msra.mxu0 %v77
    %357 = vmatprep.subr.mxu0 %v74
    %358 = vmatpush1.msra.mxu0 %v73
    %359 = vmatprep.subr.mxu0 %v70
    %360 = vmatpush1.msra.mxu0 %v69
    %361 = vmatprep.subr.mxu0 0.0
    %362 = vmatpush2.msra.mxu0 0.0
    %363 = vmatprep.subr.mxu0 0.0
    %364 = vmatpush2.msra.mxu0 0.0
    %365 = vmatprep.subr.mxu0 0.0
    %366 = vmatpush2.msra.mxu0 0.0
    %367 = vmatprep.subr.mxu0 0.0
    %368 = vmatpush2.msra.mxu0 0.0
    %369 = vmatprep.subr.mxu0 0.0
    %370 = vmatpush2.msra.mxu0 0.0
    %371 = vmatprep.subr.mxu0 0.0
    %372 = vmatpush2.msra.mxu0 0.0
    %373 = vmatprep.subr.mxu0 0.0
    %374 = vmatpush2.msra.mxu0 0.0
    %375 = vmatprep.subr.mxu0 0.0
    %376 = vmatpush2.msra.mxu0 0.0
    %377 = vmatprep.subr.mxu0 0.0
    %378 = vmatpush2.msra.mxu0 0.0
    %379 = vmatprep.subr.mxu0 0.0
    %380 = vmatpush2.msra.mxu0 0.0
    %381 = vmatprep.subr.mxu0 0.0
    %382 = vmatpush2.msra.mxu0 0.0
    %383 = vmatprep.subr.mxu0 0.0
    %384 = vmatpush2.msra.mxu0 0.0
    %385 = vmatprep.subr.mxu0 0.0
    %386 = vmatpush2.msra.mxu0 0.0
    %387 = vmatprep.subr.mxu0 0.0
    %388 = vmatpush2.msra.mxu0 0.0
    %389 = vmatprep.subr.mxu0 0.0
    %390 = vmatpush2.msra.mxu0 0.0
    %391 = vmatprep.subr.mxu0 0.0
    %392 = vmatpush2.msra.mxu0 0.0
    %393 = vmatprep.mubr.f32.mxu0 0.0
    %394 = vmatmul.mubr.f32.gmra.mxu0 %v325
    %v395 = vpop.f32.mrf.mxu0
    %v396 = vadd.f32 0.0, %v395
    %v397 = vpop.f32.mrf.mxu0
    %v398 = vadd.f32 0.0, %v397
    %399 = vdwg.mxu0
    %400 = vmatprep.subr.mxu0 %v132
    %401 = vmatpush1.msra.mxu0 %v131
    %402 = vmatprep.subr.mxu0 %v128
    %403 = vmatpush1.msra.mxu0 %v127
    %404 = vmatprep.subr.mxu0 %v124
    %405 = vmatpush1.msra.mxu0 %v123
    %406 = vmatprep.subr.mxu0 %v120
    %407 = vmatpush1.msra.mxu0 %v119
    %408 = vmatprep.subr.mxu0 %v116
    %409 = vmatpush1.msra.mxu0 %v115
    %410 = vmatprep.subr.mxu0 %v112
    %411 = vmatpush1.msra.mxu0 %v111
    %412 = vmatprep.subr.mxu0 %v108
    %413 = vmatpush1.msra.mxu0 %v107
    %414 = vmatprep.subr.mxu0 %v104
    %415 = vmatpush1.msra.mxu0 %v103
    %416 = vmatprep.subr.mxu0 %v100
    %417 = vmatpush1.msra.mxu0 %v99
    %418 = vmatprep.subr.mxu0 %v96
    %419 = vmatpush1.msra.mxu0 %v95
    %420 = vmatprep.subr.mxu0 %v92
    %421 = vmatpush1.msra.mxu0 %v91
    %422 = vmatprep.subr.mxu0 %v88
    %423 = vmatpush1.msra.mxu0 %v87
    %424 = vmatprep.subr.mxu0 %v84
    %425 = vmatpush1.msra.mxu0 %v83
    %426 = vmatprep.subr.mxu0 %v80
    %427 = vmatpush1.msra.mxu0 %v79
    %428 = vmatprep.subr.mxu0 %v76
    %429 = vmatpush1.msra.mxu0 %v75
    %430 = vmatprep.subr.mxu0 %v72
    %431 = vmatpush1.msra.mxu0 %v71
    %432 = vmatprep.subr.mxu0 0.0
    %433 = vmatpush2.msra.mxu0 0.0
    %434 = vmatprep.subr.mxu0 0.0
    %435 = vmatpush2.msra.mxu0 0.0
    %436 = vmatprep.subr.mxu0 0.0
    %437 = vmatpush2.msra.mxu0 0.0
    %438 = vmatprep.subr.mxu0 0.0
    %439 = vmatpush2.msra.mxu0 0.0
    %440 = vmatprep.subr.mxu0 0.0
    %441 = vmatpush2.msra.mxu0 0.0
    %442 = vmatprep.subr.mxu0 0.0
    %443 = vmatpush2.msra.mxu0 0.0
    %444 = vmatprep.subr.mxu0 0.0
    %445 = vmatpush2.msra.mxu0 0.0
    %446 = vmatprep.subr.mxu0 0.0
    %447 = vmatpush2.msra.mxu0 0.0
    %448 = vmatprep.subr.mxu0 0.0
    %449 = vmatpush2.msra.mxu0 0.0
    %450 = vmatprep.subr.mxu0 0.0
    %451 = vmatpush2.msra.mxu0 0.0
    %452 = vmatprep.subr.mxu0 0.0
    %453 = vmatpush2.msra.mxu0 0.0
    %454 = vmatprep.subr.mxu0 0.0
    %455 = vmatpush2.msra.mxu0 0.0
    %456 = vmatprep.subr.mxu0 0.0
    %457 = vmatpush2.msra.mxu0 0.0
    %458 = vmatprep.subr.mxu0 0.0
    %459 = vmatpush2.msra.mxu0 0.0
    %460 = vmatprep.subr.mxu0 0.0
    %461 = vmatpush2.msra.mxu0 0.0
    %462 = vmatprep.subr.mxu0 0.0
    %463 = vmatpush2.msra.mxu0 0.0
    %464 = vmatprep.mubr.f32.mxu0 0.0
    %465 = vmatmul.mubr.f32.gmra.mxu0 %v325
    %v466 = vpop.f32.mrf.mxu0
    %v467 = vadd.f32 0.0, %v466
    %v468 = vpop.f32.mrf.mxu0
    %v469 = vadd.f32 0.0, %v468
    %470 = vdwg.mxu0
    %v475 = vcombine.low %v396, %v398
    %v476 = vcombine.low %v467, %v469
    %v478 = vunpack.c.l.s4 1983009808
    %v479 = vunpack.c.0.s8 %v478
    %v480 = vlaneseq
    %v481 = vshrl.u32 %v480, 7
    %v482 = vsub.s32 %v479, %v481
    %v483 = vrot.slane %v475, %v482
    %v485 = vunpack.c.l.s4 1983009808
    %v486 = vunpack.c.0.s8 %v485
    %v487 = vlaneseq
    %v488 = vshrl.u32 %v487, 7
    %v489 = vsub.s32 %v486, %v488
    %v490 = vrot.slane %v476, %v489
    %v491 = vcombine.low %v483, %v490
    %v493 = vadd.f32 %v328, %v491
    %v494 = vmul.f32 %v493, 0.5
    %v495 = vtanh.pop %v494
    %v496 = vadd.f32 %v495, 1.0
    %v497 = vmul.f32 %v496, 0.5
    %v499 = vrot.slane %v493, 2
    %v501 = vmul.f32 %v499, 0.5
    %v502 = vtanh.pop %v501
    %v503 = vadd.f32 %v502, 1.0
    %v504 = vmul.f32 %v503, 0.5
    %v505 = vrot.slane %v493, 4
    %v507 = vtanh.pop %v505
    %v508 = vrot.slane %v493, 6
    %v510 = vmul.f32 %v508, 0.5
    %v511 = vtanh.pop %v510
    %v512 = vadd.f32 %v511, 1.0
    %v513 = vmul.f32 %v512, 0.5
    %v514 = vmul.f32 %v504, %v323
    %v515 = vmul.f32 %v497, %v507
    %v516 = vadd.f32 %v514, %v515
    %v517 = vtanh.pop %v516
    %v518 = vmul.f32 %v513, %v517
    %s519 = scalar_lea.vmem [#allocation10], 2
    %520 = vst [vmem:[%s519] sm:$0x3] %v518
    %s521 = scalar_lea.vmem [#allocation4], 16
    %v522 = vld [vmem:[%s521] sm:$0xff]
    %523 = vmatprep.subr.mxu0 %v130
    %524 = vmatpush1.msra.mxu0 %v129
    %525 = vmatprep.subr.mxu0 %v126
    %526 = vmatpush1.msra.mxu0 %v125
    %527 = vmatprep.subr.mxu0 %v122
    %528 = vmatpush1.msra.mxu0 %v121
    %529 = vmatprep.subr.mxu0 %v118
    %530 = vmatpush1.msra.mxu0 %v117
    %531 = vmatprep.subr.mxu0 %v114
    %532 = vmatpush1.msra.mxu0 %v113
    %533 = vmatprep.subr.mxu0 %v110
    %534 = vmatpush1.msra.mxu0 %v109
    %535 = vmatprep.subr.mxu0 %v106
    %536 = vmatpush1.msra.mxu0 %v105
    %537 = vmatprep.subr.mxu0 %v102
    %538 = vmatpush1.msra.mxu0 %v101
    %539 = vmatprep.subr.mxu0 %v98
    %540 = vmatpush1.msra.mxu0 %v97
    %541 = vmatprep.subr.mxu0 %v94
    %542 = vmatpush1.msra.mxu0 %v93
    %543 = vmatprep.subr.mxu0 %v90
    %544 = vmatpush1.msra.mxu0 %v89
    %545 = vmatprep.subr.mxu0 %v86
    %546 = vmatpush1.msra.mxu0 %v85
    %547 = vmatprep.subr.mxu0 %v82
    %548 = vmatpush1.msra.mxu0 %v81
    %549 = vmatprep.subr.mxu0 %v78
    %550 = vmatpush1.msra.mxu0 %v77
    %551 = vmatprep.subr.mxu0 %v74
    %552 = vmatpush1.msra.mxu0 %v73
    %553 = vmatprep.subr.mxu0 %v70
    %554 = vmatpush1.msra.mxu0 %v69
    %555 = vmatprep.subr.mxu0 0.0
    %556 = vmatpush2.msra.mxu0 0.0
    %557 = vmatprep.subr.mxu0 0.0
    %558 = vmatpush2.msra.mxu0 0.0
    %559 = vmatprep.subr.mxu0 0.0
    %560 = vmatpush2.msra.mxu0 0.0
    %561 = vmatprep.subr.mxu0 0.0
    %562 = vmatpush2.msra.mxu0 0.0
    %563 = vmatprep.subr.mxu0 0.0
    %564 = vmatpush2.msra.mxu0 0.0
    %565 = vmatprep.subr.mxu0 0.0
    %566 = vmatpush2.msra.mxu0 0.0
    %567 = vmatprep.subr.mxu0 0.0
    %568 = vmatpush2.msra.mxu0 0.0
    %569 = vmatprep.subr.mxu0 0.0
    %570 = vmatpush2.msra.mxu0 0.0
    %571 = vmatprep.subr.mxu0 0.0
    %572 = vmatpush2.msra.mxu0 0.0
    %573 = vmatprep.subr.mxu0 0.0
    %574 = vmatpush2.msra.mxu0 0.0
    %575 = vmatprep.subr.mxu0 0.0
    %576 = vmatpush2.msra.mxu0 0.0
    %577 = vmatprep.subr.mxu0 0.0
    %578 = vmatpush2.msra.mxu0 0.0
    %579 = vmatprep.subr.mxu0 0.0
    %580 = vmatpush2.msra.mxu0 0.0
    %581 = vmatprep.subr.mxu0 0.0
    %582 = vmatpush2.msra.mxu0 0.0
    %583 = vmatprep.subr.mxu0 0.0
    %584 = vmatpush2.msra.mxu0 0.0
    %585 = vmatprep.subr.mxu0 0.0
    %586 = vmatpush2.msra.mxu0 0.0
    %587 = vmatprep.mubr.f32.mxu0 0.0
    %588 = vmatmul.mubr.f32.gmra.mxu0 %v518
    %v589 = vpop.f32.mrf.mxu0
    %v590 = vadd.f32 0.0, %v589
    %v591 = vpop.f32.mrf.mxu0
    %v592 = vadd.f32 0.0, %v591
    %593 = vdwg.mxu0
    %594 = vmatprep.subr.mxu0 %v132
    %595 = vmatpush1.msra.mxu0 %v131
    %596 = vmatprep.subr.mxu0 %v128
    %597 = vmatpush1.msra.mxu0 %v127
    %598 = vmatprep.subr.mxu0 %v124
    %599 = vmatpush1.msra.mxu0 %v123
    %600 = vmatprep.subr.mxu0 %v120
    %601 = vmatpush1.msra.mxu0 %v119
    %602 = vmatprep.subr.mxu0 %v116
    %603 = vmatpush1.msra.mxu0 %v115
    %604 = vmatprep.subr.mxu0 %v112
    %605 = vmatpush1.msra.mxu0 %v111
    %606 = vmatprep.subr.mxu0 %v108
    %607 = vmatpush1.msra.mxu0 %v107
    %608 = vmatprep.subr.mxu0 %v104
    %609 = vmatpush1.msra.mxu0 %v103
    %610 = vmatprep.subr.mxu0 %v100
    %611 = vmatpush1.msra.mxu0 %v99
    %612 = vmatprep.subr.mxu0 %v96
    %613 = vmatpush1.msra.mxu0 %v95
    %614 = vmatprep.subr.mxu0 %v92
    %615 = vmatpush1.msra.mxu0 %v91
    %616 = vmatprep.subr.mxu0 %v88
    %617 = vmatpush1.msra.mxu0 %v87
    %618 = vmatprep.subr.mxu0 %v84
    %619 = vmatpush1.msra.mxu0 %v83
    %620 = vmatprep.subr.mxu0 %v80
    %621 = vmatpush1.msra.mxu0 %v79
    %622 = vmatprep.subr.mxu0 %v76
    %623 = vmatpush1.msra.mxu0 %v75
    %624 = vmatprep.subr.mxu0 %v72
    %625 = vmatpush1.msra.mxu0 %v71
    %626 = vmatprep.subr.mxu0 0.0
    %627 = vmatpush2.msra.mxu0 0.0
    %628 = vmatprep.subr.mxu0 0.0
    %629 = vmatpush2.msra.mxu0 0.0
    %630 = vmatprep.subr.mxu0 0.0
    %631 = vmatpush2.msra.mxu0 0.0
    %632 = vmatprep.subr.mxu0 0.0
    %633 = vmatpush2.msra.mxu0 0.0
    %634 = vmatprep.subr.mxu0 0.0
    %635 = vmatpush2.msra.mxu0 0.0
    %636 = vmatprep.subr.mxu0 0.0
    %637 = vmatpush2.msra.mxu0 0.0
    %638 = vmatprep.subr.mxu0 0.0
    %639 = vmatpush2.msra.mxu0 0.0
    %640 = vmatprep.subr.mxu0 0.0
    %641 = vmatpush2.msra.mxu0 0.0
    %642 = vmatprep.subr.mxu0 0.0
    %643 = vmatpush2.msra.mxu0 0.0
    %644 = vmatprep.subr.mxu0 0.0
    %645 = vmatpush2.msra.mxu0 0.0
    %646 = vmatprep.subr.mxu0 0.0
    %647 = vmatpush2.msra.mxu0 0.0
    %648 = vmatprep.subr.mxu0 0.0
    %649 = vmatpush2.msra.mxu0 0.0
    %650 = vmatprep.subr.mxu0 0.0
    %651 = vmatpush2.msra.mxu0 0.0
    %652 = vmatprep.subr.mxu0 0.0
    %653 = vmatpush2.msra.mxu0 0.0
    %654 = vmatprep.subr.mxu0 0.0
    %655 = vmatpush2.msra.mxu0 0.0
    %656 = vmatprep.subr.mxu0 0.0
    %657 = vmatpush2.msra.mxu0 0.0
    %658 = vmatprep.mubr.f32.mxu0 0.0
    %659 = vmatmul.mubr.f32.gmra.mxu0 %v518
    %v660 = vpop.f32.mrf.mxu0
    %v661 = vadd.f32 0.0, %v660
    %v662 = vpop.f32.mrf.mxu0
    %v663 = vadd.f32 0.0, %v662
    %664 = vdwg.mxu0
    %v669 = vcombine.low %v590, %v592
    %v670 = vcombine.low %v661, %v663
    %v672 = vunpack.c.l.s4 1983009808
    %v673 = vunpack.c.0.s8 %v672
    %v674 = vlaneseq
    %v675 = vshrl.u32 %v674, 7
    %v676 = vsub.s32 %v673, %v675
    %v677 = vrot.slane %v669, %v676
    %v679 = vunpack.c.l.s4 1983009808
    %v680 = vunpack.c.0.s8 %v679
    %v681 = vlaneseq
    %v682 = vshrl.u32 %v681, 7
    %v683 = vsub.s32 %v680, %v682
    %v684 = vrot.slane %v670, %v683
    %v685 = vcombine.low %v677, %v684
    %v687 = vadd.f32 %v522, %v685
    %v688 = vmul.f32 %v687, 0.5
    %v689 = vtanh.pop %v688
    %v690 = vadd.f32 %v689, 1.0
    %v691 = vmul.f32 %v690, 0.5
    %v693 = vrot.slane %v687, 2
    %v695 = vmul.f32 %v693, 0.5
    %v696 = vtanh.pop %v695
    %v697 = vadd.f32 %v696, 1.0
    %v698 = vmul.f32 %v697, 0.5
    %v699 = vrot.slane %v687, 4
    %v701 = vtanh.pop %v699
    %v702 = vrot.slane %v687, 6
    %v704 = vmul.f32 %v702, 0.5
    %v705 = vtanh.pop %v704
    %v706 = vadd.f32 %v705, 1.0
    %v707 = vmul.f32 %v706, 0.5
    %v708 = vmul.f32 %v698, %v516
    %v709 = vmul.f32 %v691, %v701
    %v710 = vadd.f32 %v708, %v709
    %v711 = vtanh.pop %v710
    %v712 = vmul.f32 %v707, %v711
    %s713 = scalar_lea.vmem [#allocation10], 4
    %714 = vst [vmem:[%s713] sm:$0x3] %v712
    %s715 = scalar_lea.vmem [#allocation4], 24
    %v716 = vld [vmem:[%s715] sm:$0xff]
    %717 = vmatprep.subr.mxu0 %v130
    %718 = vmatpush1.msra.mxu0 %v129
    %719 = vmatprep.subr.mxu0 %v126
    %720 = vmatpush1.msra.mxu0 %v125
    %721 = vmatprep.subr.mxu0 %v122
    %722 = vmatpush1.msra.mxu0 %v121
    %723 = vmatprep.subr.mxu0 %v118
    %724 = vmatpush1.msra.mxu0 %v117
    %725 = vmatprep.subr.mxu0 %v114
    %726 = vmatpush1.msra.mxu0 %v113
    %727 = vmatprep.subr.mxu0 %v110
    %728 = vmatpush1.msra.mxu0 %v109
    %729 = vmatprep.subr.mxu0 %v106
    %730 = vmatpush1.msra.mxu0 %v105
    %731 = vmatprep.subr.mxu0 %v102
    %732 = vmatpush1.msra.mxu0 %v101
    %733 = vmatprep.subr.mxu0 %v98
    %734 = vmatpush1.msra.mxu0 %v97
    %735 = vmatprep.subr.mxu0 %v94
    %736 = vmatpush1.msra.mxu0 %v93
    %737 = vmatprep.subr.mxu0 %v90
    %738 = vmatpush1.msra.mxu0 %v89
    %739 = vmatprep.subr.mxu0 %v86
    %740 = vmatpush1.msra.mxu0 %v85
    %741 = vmatprep.subr.mxu0 %v82
    %742 = vmatpush1.msra.mxu0 %v81
    %743 = vmatprep.subr.mxu0 %v78
    %744 = vmatpush1.msra.mxu0 %v77
    %745 = vmatprep.subr.mxu0 %v74
    %746 = vmatpush1.msra.mxu0 %v73
    %747 = vmatprep.subr.mxu0 %v70
    %748 = vmatpush1.msra.mxu0 %v69
    %749 = vmatprep.subr.mxu0 0.0
    %750 = vmatpush2.msra.mxu0 0.0
    %751 = vmatprep.subr.mxu0 0.0
    %752 = vmatpush2.msra.mxu0 0.0
    %753 = vmatprep.subr.mxu0 0.0
    %754 = vmatpush2.msra.mxu0 0.0
    %755 = vmatprep.subr.mxu0 0.0
    %756 = vmatpush2.msra.mxu0 0.0
    %757 = vmatprep.subr.mxu0 0.0
    %758 = vmatpush2.msra.mxu0 0.0
    %759 = vmatprep.subr.mxu0 0.0
    %760 = vmatpush2.msra.mxu0 0.0
    %761 = vmatprep.subr.mxu0 0.0
    %762 = vmatpush2.msra.mxu0 0.0
    %763 = vmatprep.subr.mxu0 0.0
    %764 = vmatpush2.msra.mxu0 0.0
    %765 = vmatprep.subr.mxu0 0.0
    %766 = vmatpush2.msra.mxu0 0.0
    %767 = vmatprep.subr.mxu0 0.0
    %768 = vmatpush2.msra.mxu0 0.0
    %769 = vmatprep.subr.mxu0 0.0
    %770 = vmatpush2.msra.mxu0 0.0
    %771 = vmatprep.subr.mxu0 0.0
    %772 = vmatpush2.msra.mxu0 0.0
    %773 = vmatprep.subr.mxu0 0.0
    %774 = vmatpush2.msra.mxu0 0.0
    %775 = vmatprep.subr.mxu0 0.0
    %776 = vmatpush2.msra.mxu0 0.0
    %777 = vmatprep.subr.mxu0 0.0
    %778 = vmatpush2.msra.mxu0 0.0
    %779 = vmatprep.subr.mxu0 0.0
    %780 = vmatpush2.msra.mxu0 0.0
    %781 = vmatprep.mubr.f32.mxu0 0.0
    %782 = vmatmul.mubr.f32.gmra.mxu0 %v712
    %v783 = vpop.f32.mrf.mxu0
    %v784 = vadd.f32 0.0, %v783
    %v785 = vpop.f32.mrf.mxu0
    %v786 = vadd.f32 0.0, %v785
    %787 = vdwg.mxu0
    %788 = vmatprep.subr.mxu0 %v132
    %789 = vmatpush1.msra.mxu0 %v131
    %790 = vmatprep.subr.mxu0 %v128
    %791 = vmatpush1.msra.mxu0 %v127
    %792 = vmatprep.subr.mxu0 %v124
    %793 = vmatpush1.msra.mxu0 %v123
    %794 = vmatprep.subr.mxu0 %v120
    %795 = vmatpush1.msra.mxu0 %v119
    %796 = vmatprep.subr.mxu0 %v116
    %797 = vmatpush1.msra.mxu0 %v115
    %798 = vmatprep.subr.mxu0 %v112
    %799 = vmatpush1.msra.mxu0 %v111
    %800 = vmatprep.subr.mxu0 %v108
    %801 = vmatpush1.msra.mxu0 %v107
    %802 = vmatprep.subr.mxu0 %v104
    %803 = vmatpush1.msra.mxu0 %v103
    %804 = vmatprep.subr.mxu0 %v100
    %805 = vmatpush1.msra.mxu0 %v99
    %806 = vmatprep.subr.mxu0 %v96
    %807 = vmatpush1.msra.mxu0 %v95
    %808 = vmatprep.subr.mxu0 %v92
    %809 = vmatpush1.msra.mxu0 %v91
    %810 = vmatprep.subr.mxu0 %v88
    %811 = vmatpush1.msra.mxu0 %v87
    %812 = vmatprep.subr.mxu0 %v84
    %813 = vmatpush1.msra.mxu0 %v83
    %814 = vmatprep.subr.mxu0 %v80
    %815 = vmatpush1.msra.mxu0 %v79
    %816 = vmatprep.subr.mxu0 %v76
    %817 = vmatpush1.msra.mxu0 %v75
    %818 = vmatprep.subr.mxu0 %v72
    %819 = vmatpush1.msra.mxu0 %v71
    %820 = vmatprep.subr.mxu0 0.0
    %821 = vmatpush2.msra.mxu0 0.0
    %822 = vmatprep.subr.mxu0 0.0
    %823 = vmatpush2.msra.mxu0 0.0
    %824 = vmatprep.subr.mxu0 0.0
    %825 = vmatpush2.msra.mxu0 0.0
    %826 = vmatprep.subr.mxu0 0.0
    %827 = vmatpush2.msra.mxu0 0.0
    %828 = vmatprep.subr.mxu0 0.0
    %829 = vmatpush2.msra.mxu0 0.0
    %830 = vmatprep.subr.mxu0 0.0
    %831 = vmatpush2.msra.mxu0 0.0
    %832 = vmatprep.subr.mxu0 0.0
    %833 = vmatpush2.msra.mxu0 0.0
    %834 = vmatprep.subr.mxu0 0.0
    %835 = vmatpush2.msra.mxu0 0.0
    %836 = vmatprep.subr.mxu0 0.0
    %837 = vmatpush2.msra.mxu0 0.0
    %838 = vmatprep.subr.mxu0 0.0
    %839 = vmatpush2.msra.mxu0 0.0
    %840 = vmatprep.subr.mxu0 0.0
    %841 = vmatpush2.msra.mxu0 0.0
    %842 = vmatprep.subr.mxu0 0.0
    %843 = vmatpush2.msra.mxu0 0.0
    %844 = vmatprep.subr.mxu0 0.0
    %845 = vmatpush2.msra.mxu0 0.0
    %846 = vmatprep.subr.mxu0 0.0
    %847 = vmatpush2.msra.mxu0 0.0
    %848 = vmatprep.subr.mxu0 0.0
    %849 = vmatpush2.msra.mxu0 0.0
    %850 = vmatprep.subr.mxu0 0.0
    %851 = vmatpush2.msra.mxu0 0.0
    %852 = vmatprep.mubr.f32.mxu0 0.0
    %853 = vmatmul.mubr.f32.gmra.mxu0 %v712
    %v854 = vpop.f32.mrf.mxu0
    %v855 = vadd.f32 0.0, %v854
    %v856 = vpop.f32.mrf.mxu0
    %v857 = vadd.f32 0.0, %v856
    %858 = vdwg.mxu0
    %v863 = vcombine.low %v784, %v786
    %v864 = vcombine.low %v855, %v857
    %v866 = vunpack.c.l.s4 1983009808
    %v867 = vunpack.c.0.s8 %v866
    %v868 = vlaneseq
    %v869 = vshrl.u32 %v868, 7
    %v870 = vsub.s32 %v867, %v869
    %v871 = vrot.slane %v863, %v870
    %v873 = vunpack.c.l.s4 1983009808
    %v874 = vunpack.c.0.s8 %v873
    %v875 = vlaneseq
    %v876 = vshrl.u32 %v875, 7
    %v877 = vsub.s32 %v874, %v876
    %v878 = vrot.slane %v864, %v877
    %v879 = vcombine.low %v871, %v878
    %v881 = vadd.f32 %v716, %v879
    %v882 = vmul.f32 %v881, 0.5
    %v883 = vtanh.pop %v882
    %v884 = vadd.f32 %v883, 1.0
    %v885 = vmul.f32 %v884, 0.5
    %v887 = vrot.slane %v881, 2
    %v889 = vmul.f32 %v887, 0.5
    %v890 = vtanh.pop %v889
    %v891 = vadd.f32 %v890, 1.0
    %v892 = vmul.f32 %v891, 0.5
    %v893 = vrot.slane %v881, 4
    %v895 = vtanh.pop %v893
    %v896 = vrot.slane %v881, 6
    %v898 = vmul.f32 %v896, 0.5
    %v899 = vtanh.pop %v898
    %v900 = vadd.f32 %v899, 1.0
    %v901 = vmul.f32 %v900, 0.5
    %v902 = vmul.f32 %v892, %v710
    %v903 = vmul.f32 %v885, %v895
    %v904 = vadd.f32 %v902, %v903
    %v905 = vtanh.pop %v904
    %v906 = vmul.f32 %v901, %v905
    %s907 = scalar_lea.vmem [#allocation10], 6
    %908 = vst [vmem:[%s907] sm:$0x3] %v906
    %s909 = scalar_lea.vmem [#allocation4], 32
    %v910 = vld [vmem:[%s909] sm:$0xff]
    %911 = vmatprep.subr.mxu0 %v130
    %912 = vmatpush1.msra.mxu0 %v129
    %913 = vmatprep.subr.mxu0 %v126
    %914 = vmatpush1.msra.mxu0 %v125
    %915 = vmatprep.subr.mxu0 %v122
    %916 = vmatpush1.msra.mxu0 %v121
    %917 = vmatprep.subr.mxu0 %v118
    %918 = vmatpush1.msra.mxu0 %v117
    %919 = vmatprep.subr.mxu0 %v114
    %920 = vmatpush1.msra.mxu0 %v113
    %921 = vmatprep.subr.mxu0 %v110
    %922 = vmatpush1.msra.mxu0 %v109
    %923 = vmatprep.subr.mxu0 %v106
    %924 = vmatpush1.msra.mxu0 %v105
    %925 = vmatprep.subr.mxu0 %v102
    %926 = vmatpush1.msra.mxu0 %v101
    %927 = vmatprep.subr.mxu0 %v98
    %928 = vmatpush1.msra.mxu0 %v97
    %929 = vmatprep.subr.mxu0 %v94
    %930 = vmatpush1.msra.mxu0 %v93
    %931 = vmatprep.subr.mxu0 %v90
    %932 = vmatpush1.msra.mxu0 %v89
    %933 = vmatprep.subr.mxu0 %v86
    %934 = vmatpush1.msra.mxu0 %v85
    %935 = vmatprep.subr.mxu0 %v82
    %936 = vmatpush1.msra.mxu0 %v81
    %937 = vmatprep.subr.mxu0 %v78
    %938 = vmatpush1.msra.mxu0 %v77
    %939 = vmatprep.subr.mxu0 %v74
    %940 = vmatpush1.msra.mxu0 %v73
    %941 = vmatprep.subr.mxu0 %v70
    %942 = vmatpush1.msra.mxu0 %v69
    %943 = vmatprep.subr.mxu0 0.0
    %944 = vmatpush2.msra.mxu0 0.0
    %945 = vmatprep.subr.mxu0 0.0
    %946 = vmatpush2.msra.mxu0 0.0
    %947 = vmatprep.subr.mxu0 0.0
    %948 = vmatpush2.msra.mxu0 0.0
    %949 = vmatprep.subr.mxu0 0.0
    %950 = vmatpush2.msra.mxu0 0.0
    %951 = vmatprep.subr.mxu0 0.0
    %952 = vmatpush2.msra.mxu0 0.0
    %953 = vmatprep.subr.mxu0 0.0
    %954 = vmatpush2.msra.mxu0 0.0
    %955 = vmatprep.subr.mxu0 0.0
    %956 = vmatpush2.msra.mxu0 0.0
    %957 = vmatprep.subr.mxu0 0.0
    %958 = vmatpush2.msra.mxu0 0.0
    %959 = vmatprep.subr.mxu0 0.0
    %960 = vmatpush2.msra.mxu0 0.0
    %961 = vmatprep.subr.mxu0 0.0
    %962 = vmatpush2.msra.mxu0 0.0
    %963 = vmatprep.subr.mxu0 0.0
    %964 = vmatpush2.msra.mxu0 0.0
    %965 = vmatprep.subr.mxu0 0.0
    %966 = vmatpush2.msra.mxu0 0.0
    %967 = vmatprep.subr.mxu0 0.0
    %968 = vmatpush2.msra.mxu0 0.0
    %969 = vmatprep.subr.mxu0 0.0
    %970 = vmatpush2.msra.mxu0 0.0
    %971 = vmatprep.subr.mxu0 0.0
    %972 = vmatpush2.msra.mxu0 0.0
    %973 = vmatprep.subr.mxu0 0.0
    %974 = vmatpush2.msra.mxu0 0.0
    %975 = vmatprep.mubr.f32.mxu0 0.0
    %976 = vmatmul.mubr.f32.gmra.mxu0 %v906
    %v977 = vpop.f32.mrf.mxu0
    %v978 = vadd.f32 0.0, %v977
    %v979 = vpop.f32.mrf.mxu0
    %v980 = vadd.f32 0.0, %v979
    %981 = vdwg.mxu0
    %982 = vmatprep.subr.mxu0 %v132
    %983 = vmatpush1.msra.mxu0 %v131
    %984 = vmatprep.subr.mxu0 %v128
    %985 = vmatpush1.msra.mxu0 %v127
    %986 = vmatprep.subr.mxu0 %v124
    %987 = vmatpush1.msra.mxu0 %v123
    %988 = vmatprep.subr.mxu0 %v120
    %989 = vmatpush1.msra.mxu0 %v119
    %990 = vmatprep.subr.mxu0 %v116
    %991 = vmatpush1.msra.mxu0 %v115
    %992 = vmatprep.subr.mxu0 %v112
    %993 = vmatpush1.msra.mxu0 %v111
    %994 = vmatprep.subr.mxu0 %v108
    %995 = vmatpush1.msra.mxu0 %v107
    %996 = vmatprep.subr.mxu0 %v104
    %997 = vmatpush1.msra.mxu0 %v103
    %998 = vmatprep.subr.mxu0 %v100
    %999 = vmatpush1.msra.mxu0 %v99
    %1000 = vmatprep.subr.mxu0 %v96
    %1001 = vmatpush1.msra.mxu0 %v95
    %1002 = vmatprep.subr.mxu0 %v92
    %1003 = vmatpush1.msra.mxu0 %v91
    %1004 = vmatprep.subr.mxu0 %v88
    %1005 = vmatpush1.msra.mxu0 %v87
    %1006 = vmatprep.subr.mxu0 %v84
    %1007 = vmatpush1.msra.mxu0 %v83
    %1008 = vmatprep.subr.mxu0 %v80
    %1009 = vmatpush1.msra.mxu0 %v79
    %1010 = vmatprep.subr.mxu0 %v76
    %1011 = vmatpush1.msra.mxu0 %v75
    %1012 = vmatprep.subr.mxu0 %v72
    %1013 = vmatpush1.msra.mxu0 %v71
    %1014 = vmatprep.subr.mxu0 0.0
    %1015 = vmatpush2.msra.mxu0 0.0
    %1016 = vmatprep.subr.mxu0 0.0
    %1017 = vmatpush2.msra.mxu0 0.0
    %1018 = vmatprep.subr.mxu0 0.0
    %1019 = vmatpush2.msra.mxu0 0.0
    %1020 = vmatprep.subr.mxu0 0.0
    %1021 = vmatpush2.msra.mxu0 0.0
    %1022 = vmatprep.subr.mxu0 0.0
    %1023 = vmatpush2.msra.mxu0 0.0
    %1024 = vmatprep.subr.mxu0 0.0
    %1025 = vmatpush2.msra.mxu0 0.0
    %1026 = vmatprep.subr.mxu0 0.0
    %1027 = vmatpush2.msra.mxu0 0.0
    %1028 = vmatprep.subr.mxu0 0.0
    %1029 = vmatpush2.msra.mxu0 0.0
    %1030 = vmatprep.subr.mxu0 0.0
    %1031 = vmatpush2.msra.mxu0 0.0
    %1032 = vmatprep.subr.mxu0 0.0
    %1033 = vmatpush2.msra.mxu0 0.0
    %1034 = vmatprep.subr.mxu0 0.0
    %1035 = vmatpush2.msra.mxu0 0.0
    %1036 = vmatprep.subr.mxu0 0.0
    %1037 = vmatpush2.msra.mxu0 0.0
    %1038 = vmatprep.subr.mxu0 0.0
    %1039 = vmatpush2.msra.mxu0 0.0
    %1040 = vmatprep.subr.mxu0 0.0
    %1041 = vmatpush2.msra.mxu0 0.0
    %1042 = vmatprep.subr.mxu0 0.0
    %1043 = vmatpush2.msra.mxu0 0.0
    %1044 = vmatprep.subr.mxu0 0.0
    %1045 = vmatpush2.msra.mxu0 0.0
    %1046 = vmatprep.mubr.f32.mxu0 0.0
    %1047 = vmatmul.mubr.f32.gmra.mxu0 %v906
    %v1048 = vpop.f32.mrf.mxu0
    %v1049 = vadd.f32 0.0, %v1048
    %v1050 = vpop.f32.mrf.mxu0
    %v1051 = vadd.f32 0.0, %v1050
    %1052 = vdwg.mxu0
    %v1057 = vcombine.low %v978, %v980
    %v1058 = vcombine.low %v1049, %v1051
    %v1060 = vunpack.c.l.s4 1983009808
    %v1061 = vunpack.c.0.s8 %v1060
    %v1062 = vlaneseq
    %v1063 = vshrl.u32 %v1062, 7
    %v1064 = vsub.s32 %v1061, %v1063
    %v1065 = vrot.slane %v1057, %v1064
    %v1067 = vunpack.c.l.s4 1983009808
    %v1068 = vunpack.c.0.s8 %v1067
    %v1069 = vlaneseq
    %v1070 = vshrl.u32 %v1069, 7
    %v1071 = vsub.s32 %v1068, %v1070
    %v1072 = vrot.slane %v1058, %v1071
    %v1073 = vcombine.low %v1065, %v1072
    %v1075 = vadd.f32 %v910, %v1073
    %v1076 = vmul.f32 %v1075, 0.5
    %v1077 = vtanh.pop %v1076
    %v1078 = vadd.f32 %v1077, 1.0
    %v1079 = vmul.f32 %v1078, 0.5
    %v1081 = vrot.slane %v1075, 2
    %v1083 = vmul.f32 %v1081, 0.5
    %v1084 = vtanh.pop %v1083
    %v1085 = vadd.f32 %v1084, 1.0
    %v1086 = vmul.f32 %v1085, 0.5
    %v1087 = vrot.slane %v1075, 4
    %v1089 = vtanh.pop %v1087
    %v1090 = vrot.slane %v1075, 6
    %v1092 = vmul.f32 %v1090, 0.5
    %v1093 = vtanh.pop %v1092
    %v1094 = vadd.f32 %v1093, 1.0
    %v1095 = vmul.f32 %v1094, 0.5
    %v1096 = vmul.f32 %v1086, %v904
    %v1097 = vmul.f32 %v1079, %v1089
    %v1098 = vadd.f32 %v1096, %v1097
    %v1099 = vtanh.pop %v1098
    %v1100 = vmul.f32 %v1095, %v1099
    %s1101 = scalar_lea.vmem [#allocation10], 8
    %1102 = vst [vmem:[%s1101] sm:$0x3] %v1100
    %s1103 = scalar_lea.vmem [#allocation4], 40
    %v1104 = vld [vmem:[%s1103] sm:$0xff]
    %1105 = vmatprep.subr.mxu0 %v130
    %1106 = vmatpush1.msra.mxu0 %v129
    %1107 = vmatprep.subr.mxu0 %v126
    %1108 = vmatpush1.msra.mxu0 %v125
    %1109 = vmatprep.subr.mxu0 %v122
    %1110 = vmatpush1.msra.mxu0 %v121
    %1111 = vmatprep.subr.mxu0 %v118
    %1112 = vmatpush1.msra.mxu0 %v117
    %1113 = vmatprep.subr.mxu0 %v114
    %1114 = vmatpush1.msra.mxu0 %v113
    %1115 = vmatprep.subr.mxu0 %v110
    %1116 = vmatpush1.msra.mxu0 %v109
    %1117 = vmatprep.subr.mxu0 %v106
    %1118 = vmatpush1.msra.mxu0 %v105
    %1119 = vmatprep.subr.mxu0 %v102
    %1120 = vmatpush1.msra.mxu0 %v101
    %1121 = vmatprep.subr.mxu0 %v98
    %1122 = vmatpush1.msra.mxu0 %v97
    %1123 = vmatprep.subr.mxu0 %v94
    %1124 = vmatpush1.msra.mxu0 %v93
    %1125 = vmatprep.subr.mxu0 %v90
    %1126 = vmatpush1.msra.mxu0 %v89
    %1127 = vmatprep.subr.mxu0 %v86
    %1128 = vmatpush1.msra.mxu0 %v85
    %1129 = vmatprep.subr.mxu0 %v82
    %1130 = vmatpush1.msra.mxu0 %v81
    %1131 = vmatprep.subr.mxu0 %v78
    %1132 = vmatpush1.msra.mxu0 %v77
    %1133 = vmatprep.subr.mxu0 %v74
    %1134 = vmatpush1.msra.mxu0 %v73
    %1135 = vmatprep.subr.mxu0 %v70
    %1136 = vmatpush1.msra.mxu0 %v69
    %1137 = vmatprep.subr.mxu0 0.0
    %1138 = vmatpush2.msra.mxu0 0.0
    %1139 = vmatprep.subr.mxu0 0.0
    %1140 = vmatpush2.msra.mxu0 0.0
    %1141 = vmatprep.subr.mxu0 0.0
    %1142 = vmatpush2.msra.mxu0 0.0
    %1143 = vmatprep.subr.mxu0 0.0
    %1144 = vmatpush2.msra.mxu0 0.0
    %1145 = vmatprep.subr.mxu0 0.0
    %1146 = vmatpush2.msra.mxu0 0.0
    %1147 = vmatprep.subr.mxu0 0.0
    %1148 = vmatpush2.msra.mxu0 0.0
    %1149 = vmatprep.subr.mxu0 0.0
    %1150 = vmatpush2.msra.mxu0 0.0
    %1151 = vmatprep.subr.mxu0 0.0
    %1152 = vmatpush2.msra.mxu0 0.0
    %1153 = vmatprep.subr.mxu0 0.0
    %1154 = vmatpush2.msra.mxu0 0.0
    %1155 = vmatprep.subr.mxu0 0.0
    %1156 = vmatpush2.msra.mxu0 0.0
    %1157 = vmatprep.subr.mxu0 0.0
    %1158 = vmatpush2.msra.mxu0 0.0
    %1159 = vmatprep.subr.mxu0 0.0
    %1160 = vmatpush2.msra.mxu0 0.0
    %1161 = vmatprep.subr.mxu0 0.0
    %1162 = vmatpush2.msra.mxu0 0.0
    %1163 = vmatprep.subr.mxu0 0.0
    %1164 = vmatpush2.msra.mxu0 0.0
    %1165 = vmatprep.subr.mxu0 0.0
    %1166 = vmatpush2.msra.mxu0 0.0
    %1167 = vmatprep.subr.mxu0 0.0
    %1168 = vmatpush2.msra.mxu0 0.0
    %1169 = vmatprep.mubr.f32.mxu0 0.0
    %1170 = vmatmul.mubr.f32.gmra.mxu0 %v1100
    %v1171 = vpop.f32.mrf.mxu0
    %v1172 = vadd.f32 0.0, %v1171
    %v1173 = vpop.f32.mrf.mxu0
    %v1174 = vadd.f32 0.0, %v1173
    %1175 = vdwg.mxu0
    %1176 = vmatprep.subr.mxu0 %v132
    %1177 = vmatpush1.msra.mxu0 %v131
    %1178 = vmatprep.subr.mxu0 %v128
    %1179 = vmatpush1.msra.mxu0 %v127
    %1180 = vmatprep.subr.mxu0 %v124
    %1181 = vmatpush1.msra.mxu0 %v123
    %1182 = vmatprep.subr.mxu0 %v120
    %1183 = vmatpush1.msra.mxu0 %v119
    %1184 = vmatprep.subr.mxu0 %v116
    %1185 = vmatpush1.msra.mxu0 %v115
    %1186 = vmatprep.subr.mxu0 %v112
    %1187 = vmatpush1.msra.mxu0 %v111
    %1188 = vmatprep.subr.mxu0 %v108
    %1189 = vmatpush1.msra.mxu0 %v107
    %1190 = vmatprep.subr.mxu0 %v104
    %1191 = vmatpush1.msra.mxu0 %v103
    %1192 = vmatprep.subr.mxu0 %v100
    %1193 = vmatpush1.msra.mxu0 %v99
    %1194 = vmatprep.subr.mxu0 %v96
    %1195 = vmatpush1.msra.mxu0 %v95
    %1196 = vmatprep.subr.mxu0 %v92
    %1197 = vmatpush1.msra.mxu0 %v91
    %1198 = vmatprep.subr.mxu0 %v88
    %1199 = vmatpush1.msra.mxu0 %v87
    %1200 = vmatprep.subr.mxu0 %v84
    %1201 = vmatpush1.msra.mxu0 %v83
    %1202 = vmatprep.subr.mxu0 %v80
    %1203 = vmatpush1.msra.mxu0 %v79
    %1204 = vmatprep.subr.mxu0 %v76
    %1205 = vmatpush1.msra.mxu0 %v75
    %1206 = vmatprep.subr.mxu0 %v72
    %1207 = vmatpush1.msra.mxu0 %v71
    %1208 = vmatprep.subr.mxu0 0.0
    %1209 = vmatpush2.msra.mxu0 0.0
    %1210 = vmatprep.subr.mxu0 0.0
    %1211 = vmatpush2.msra.mxu0 0.0
    %1212 = vmatprep.subr.mxu0 0.0
    %1213 = vmatpush2.msra.mxu0 0.0
    %1214 = vmatprep.subr.mxu0 0.0
    %1215 = vmatpush2.msra.mxu0 0.0
    %1216 = vmatprep.subr.mxu0 0.0
    %1217 = vmatpush2.msra.mxu0 0.0
    %1218 = vmatprep.subr.mxu0 0.0
    %1219 = vmatpush2.msra.mxu0 0.0
    %1220 = vmatprep.subr.mxu0 0.0
    %1221 = vmatpush2.msra.mxu0 0.0
    %1222 = vmatprep.subr.mxu0 0.0
    %1223 = vmatpush2.msra.mxu0 0.0
    %1224 = vmatprep.subr.mxu0 0.0
    %1225 = vmatpush2.msra.mxu0 0.0
    %1226 = vmatprep.subr.mxu0 0.0
    %1227 = vmatpush2.msra.mxu0 0.0
    %1228 = vmatprep.subr.mxu0 0.0
    %1229 = vmatpush2.msra.mxu0 0.0
    %1230 = vmatprep.subr.mxu0 0.0
    %1231 = vmatpush2.msra.mxu0 0.0
    %1232 = vmatprep.subr.mxu0 0.0
    %1233 = vmatpush2.msra.mxu0 0.0
    %1234 = vmatprep.subr.mxu0 0.0
    %1235 = vmatpush2.msra.mxu0 0.0
    %1236 = vmatprep.subr.mxu0 0.0
    %1237 = vmatpush2.msra.mxu0 0.0
    %1238 = vmatprep.subr.mxu0 0.0
    %1239 = vmatpush2.msra.mxu0 0.0
    %1240 = vmatprep.mubr.f32.mxu0 0.0
    %1241 = vmatmul.mubr.f32.gmra.mxu0 %v1100
    %v1242 = vpop.f32.mrf.mxu0
    %v1243 = vadd.f32 0.0, %v1242
    %v1244 = vpop.f32.mrf.mxu0
    %v1245 = vadd.f32 0.0, %v1244
    %1246 = vdwg.mxu0
    %v1251 = vcombine.low %v1172, %v1174
    %v1252 = vcombine.low %v1243, %v1245
    %v1254 = vunpack.c.l.s4 1983009808
    %v1255 = vunpack.c.0.s8 %v1254
    %v1256 = vlaneseq
    %v1257 = vshrl.u32 %v1256, 7
    %v1258 = vsub.s32 %v1255, %v1257
    %v1259 = vrot.slane %v1251, %v1258
    %v1261 = vunpack.c.l.s4 1983009808
    %v1262 = vunpack.c.0.s8 %v1261
    %v1263 = vlaneseq
    %v1264 = vshrl.u32 %v1263, 7
    %v1265 = vsub.s32 %v1262, %v1264
    %v1266 = vrot.slane %v1252, %v1265
    %v1267 = vcombine.low %v1259, %v1266
    %v1269 = vadd.f32 %v1104, %v1267
    %v1270 = vmul.f32 %v1269, 0.5
    %v1271 = vtanh.pop %v1270
    %v1272 = vadd.f32 %v1271, 1.0
    %v1273 = vmul.f32 %v1272, 0.5
    %v1275 = vrot.slane %v1269, 2
    %v1277 = vmul.f32 %v1275, 0.5
    %v1278 = vtanh.pop %v1277
    %v1279 = vadd.f32 %v1278, 1.0
    %v1280 = vmul.f32 %v1279, 0.5
    %v1281 = vrot.slane %v1269, 4
    %v1283 = vtanh.pop %v1281
    %v1284 = vrot.slane %v1269, 6
    %v1286 = vmul.f32 %v1284, 0.5
    %v1287 = vtanh.pop %v1286
    %v1288 = vadd.f32 %v1287, 1.0
    %v1289 = vmul.f32 %v1288, 0.5
    %v1290 = vmul.f32 %v1280, %v1098
    %v1291 = vmul.f32 %v1273, %v1283
    %v1292 = vadd.f32 %v1290, %v1291
    %v1293 = vtanh.pop %v1292
    %v1294 = vmul.f32 %v1289, %v1293
    %s1295 = scalar_lea.vmem [#allocation10], 10
    %1296 = vst [vmem:[%s1295] sm:$0x3] %v1294
    %s1297 = scalar_lea.vmem [#allocation4], 48
    %v1298 = vld [vmem:[%s1297] sm:$0xff]
    %1299 = vmatprep.subr.mxu0 %v130
    %1300 = vmatpush1.msra.mxu0 %v129
    %1301 = vmatprep.subr.mxu0 %v126
    %1302 = vmatpush1.msra.mxu0 %v125
    %1303 = vmatprep.subr.mxu0 %v122
    %1304 = vmatpush1.msra.mxu0 %v121
    %1305 = vmatprep.subr.mxu0 %v118
    %1306 = vmatpush1.msra.mxu0 %v117
    %1307 = vmatprep.subr.mxu0 %v114
    %1308 = vmatpush1.msra.mxu0 %v113
    %1309 = vmatprep.subr.mxu0 %v110
    %1310 = vmatpush1.msra.mxu0 %v109
    %1311 = vmatprep.subr.mxu0 %v106
    %1312 = vmatpush1.msra.mxu0 %v105
    %1313 = vmatprep.subr.mxu0 %v102
    %1314 = vmatpush1.msra.mxu0 %v101
    %1315 = vmatprep.subr.mxu0 %v98
    %1316 = vmatpush1.msra.mxu0 %v97
    %1317 = vmatprep.subr.mxu0 %v94
    %1318 = vmatpush1.msra.mxu0 %v93
    %1319 = vmatprep.subr.mxu0 %v90
    %1320 = vmatpush1.msra.mxu0 %v89
    %1321 = vmatprep.subr.mxu0 %v86
    %1322 = vmatpush1.msra.mxu0 %v85
    %1323 = vmatprep.subr.mxu0 %v82
    %1324 = vmatpush1.msra.mxu0 %v81
    %1325 = vmatprep.subr.mxu0 %v78
    %1326 = vmatpush1.msra.mxu0 %v77
    %1327 = vmatprep.subr.mxu0 %v74
    %1328 = vmatpush1.msra.mxu0 %v73
    %1329 = vmatprep.subr.mxu0 %v70
    %1330 = vmatpush1.msra.mxu0 %v69
    %1331 = vmatprep.subr.mxu0 0.0
    %1332 = vmatpush2.msra.mxu0 0.0
    %1333 = vmatprep.subr.mxu0 0.0
    %1334 = vmatpush2.msra.mxu0 0.0
    %1335 = vmatprep.subr.mxu0 0.0
    %1336 = vmatpush2.msra.mxu0 0.0
    %1337 = vmatprep.subr.mxu0 0.0
    %1338 = vmatpush2.msra.mxu0 0.0
    %1339 = vmatprep.subr.mxu0 0.0
    %1340 = vmatpush2.msra.mxu0 0.0
    %1341 = vmatprep.subr.mxu0 0.0
    %1342 = vmatpush2.msra.mxu0 0.0
    %1343 = vmatprep.subr.mxu0 0.0
    %1344 = vmatpush2.msra.mxu0 0.0
    %1345 = vmatprep.subr.mxu0 0.0
    %1346 = vmatpush2.msra.mxu0 0.0
    %1347 = vmatprep.subr.mxu0 0.0
    %1348 = vmatpush2.msra.mxu0 0.0
    %1349 = vmatprep.subr.mxu0 0.0
    %1350 = vmatpush2.msra.mxu0 0.0
    %1351 = vmatprep.subr.mxu0 0.0
    %1352 = vmatpush2.msra.mxu0 0.0
    %1353 = vmatprep.subr.mxu0 0.0
    %1354 = vmatpush2.msra.mxu0 0.0
    %1355 = vmatprep.subr.mxu0 0.0
    %1356 = vmatpush2.msra.mxu0 0.0
    %1357 = vmatprep.subr.mxu0 0.0
    %1358 = vmatpush2.msra.mxu0 0.0
    %1359 = vmatprep.subr.mxu0 0.0
    %1360 = vmatpush2.msra.mxu0 0.0
    %1361 = vmatprep.subr.mxu0 0.0
    %1362 = vmatpush2.msra.mxu0 0.0
    %1363 = vmatprep.mubr.f32.mxu0 0.0
    %1364 = vmatmul.mubr.f32.gmra.mxu0 %v1294
    %v1365 = vpop.f32.mrf.mxu0
    %v1366 = vadd.f32 0.0, %v1365
    %v1367 = vpop.f32.mrf.mxu0
    %v1368 = vadd.f32 0.0, %v1367
    %1369 = vdwg.mxu0
    %1370 = vmatprep.subr.mxu0 %v132
    %1371 = vmatpush1.msra.mxu0 %v131
    %1372 = vmatprep.subr.mxu0 %v128
    %1373 = vmatpush1.msra.mxu0 %v127
    %1374 = vmatprep.subr.mxu0 %v124
    %1375 = vmatpush1.msra.mxu0 %v123
    %1376 = vmatprep.subr.mxu0 %v120
    %1377 = vmatpush1.msra.mxu0 %v119
    %1378 = vmatprep.subr.mxu0 %v116
    %1379 = vmatpush1.msra.mxu0 %v115
    %1380 = vmatprep.subr.mxu0 %v112
    %1381 = vmatpush1.msra.mxu0 %v111
    %1382 = vmatprep.subr.mxu0 %v108
    %1383 = vmatpush1.msra.mxu0 %v107
    %1384 = vmatprep.subr.mxu0 %v104
    %1385 = vmatpush1.msra.mxu0 %v103
    %1386 = vmatprep.subr.mxu0 %v100
    %1387 = vmatpush1.msra.mxu0 %v99
    %1388 = vmatprep.subr.mxu0 %v96
    %1389 = vmatpush1.msra.mxu0 %v95
    %1390 = vmatprep.subr.mxu0 %v92
    %1391 = vmatpush1.msra.mxu0 %v91
    %1392 = vmatprep.subr.mxu0 %v88
    %1393 = vmatpush1.msra.mxu0 %v87
    %1394 = vmatprep.subr.mxu0 %v84
    %1395 = vmatpush1.msra.mxu0 %v83
    %1396 = vmatprep.subr.mxu0 %v80
    %1397 = vmatpush1.msra.mxu0 %v79
    %1398 = vmatprep.subr.mxu0 %v76
    %1399 = vmatpush1.msra.mxu0 %v75
    %1400 = vmatprep.subr.mxu0 %v72
    %1401 = vmatpush1.msra.mxu0 %v71
    %1402 = vmatprep.subr.mxu0 0.0
    %1403 = vmatpush2.msra.mxu0 0.0
    %1404 = vmatprep.subr.mxu0 0.0
    %1405 = vmatpush2.msra.mxu0 0.0
    %1406 = vmatprep.subr.mxu0 0.0
    %1407 = vmatpush2.msra.mxu0 0.0
    %1408 = vmatprep.subr.mxu0 0.0
    %1409 = vmatpush2.msra.mxu0 0.0
    %1410 = vmatprep.subr.mxu0 0.0
    %1411 = vmatpush2.msra.mxu0 0.0
    %1412 = vmatprep.subr.mxu0 0.0
    %1413 = vmatpush2.msra.mxu0 0.0
    %1414 = vmatprep.subr.mxu0 0.0
    %1415 = vmatpush2.msra.mxu0 0.0
    %1416 = vmatprep.subr.mxu0 0.0
    %1417 = vmatpush2.msra.mxu0 0.0
    %1418 = vmatprep.subr.mxu0 0.0
    %1419 = vmatpush2.msra.mxu0 0.0
    %1420 = vmatprep.subr.mxu0 0.0
    %1421 = vmatpush2.msra.mxu0 0.0
    %1422 = vmatprep.subr.mxu0 0.0
    %1423 = vmatpush2.msra.mxu0 0.0
    %1424 = vmatprep.subr.mxu0 0.0
    %1425 = vmatpush2.msra.mxu0 0.0
    %1426 = vmatprep.subr.mxu0 0.0
    %1427 = vmatpush2.msra.mxu0 0.0
    %1428 = vmatprep.subr.mxu0 0.0
    %1429 = vmatpush2.msra.mxu0 0.0
    %1430 = vmatprep.subr.mxu0 0.0
    %1431 = vmatpush2.msra.mxu0 0.0
    %1432 = vmatprep.subr.mxu0 0.0
    %1433 = vmatpush2.msra.mxu0 0.0
    %1434 = vmatprep.mubr.f32.mxu0 0.0
    %1435 = vmatmul.mubr.f32.gmra.mxu0 %v1294
    %v1436 = vpop.f32.mrf.mxu0
    %v1437 = vadd.f32 0.0, %v1436
    %v1438 = vpop.f32.mrf.mxu0
    %v1439 = vadd.f32 0.0, %v1438
    %1440 = vdwg.mxu0
    %v1445 = vcombine.low %v1366, %v1368
    %v1446 = vcombine.low %v1437, %v1439
    %v1448 = vunpack.c.l.s4 1983009808
    %v1449 = vunpack.c.0.s8 %v1448
    %v1450 = vlaneseq
    %v1451 = vshrl.u32 %v1450, 7
    %v1452 = vsub.s32 %v1449, %v1451
    %v1453 = vrot.slane %v1445, %v1452
    %v1455 = vunpack.c.l.s4 1983009808
    %v1456 = vunpack.c.0.s8 %v1455
    %v1457 = vlaneseq
    %v1458 = vshrl.u32 %v1457, 7
    %v1459 = vsub.s32 %v1456, %v1458
    %v1460 = vrot.slane %v1446, %v1459
    %v1461 = vcombine.low %v1453, %v1460
    %v1463 = vadd.f32 %v1298, %v1461
    %v1464 = vmul.f32 %v1463, 0.5
    %v1465 = vtanh.pop %v1464
    %v1466 = vadd.f32 %v1465, 1.0
    %v1467 = vmul.f32 %v1466, 0.5
    %v1469 = vrot.slane %v1463, 2
    %v1471 = vmul.f32 %v1469, 0.5
    %v1472 = vtanh.pop %v1471
    %v1473 = vadd.f32 %v1472, 1.0
    %v1474 = vmul.f32 %v1473, 0.5
    %v1475 = vrot.slane %v1463, 4
    %v1477 = vtanh.pop %v1475
    %v1478 = vrot.slane %v1463, 6
    %v1480 = vmul.f32 %v1478, 0.5
    %v1481 = vtanh.pop %v1480
    %v1482 = vadd.f32 %v1481, 1.0
    %v1483 = vmul.f32 %v1482, 0.5
    %v1484 = vmul.f32 %v1474, %v1292
    %v1485 = vmul.f32 %v1467, %v1477
    %v1486 = vadd.f32 %v1484, %v1485
    %v1487 = vtanh.pop %v1486
    %v1488 = vmul.f32 %v1483, %v1487
    %s1489 = scalar_lea.vmem [#allocation10], 12
    %1490 = vst [vmem:[%s1489] sm:$0x3] %v1488
    %s1491 = scalar_lea.vmem [#allocation4], 56
    %v1492 = vld [vmem:[%s1491] sm:$0xff]
    %1493 = vmatprep.subr.mxu0 %v130
    %1494 = vmatpush1.msra.mxu0 %v129
    %1495 = vmatprep.subr.mxu0 %v126
    %1496 = vmatpush1.msra.mxu0 %v125
    %1497 = vmatprep.subr.mxu0 %v122
    %1498 = vmatpush1.msra.mxu0 %v121
    %1499 = vmatprep.subr.mxu0 %v118
    %1500 = vmatpush1.msra.mxu0 %v117
    %1501 = vmatprep.subr.mxu0 %v114
    %1502 = vmatpush1.msra.mxu0 %v113
    %1503 = vmatprep.subr.mxu0 %v110
    %1504 = vmatpush1.msra.mxu0 %v109
    %1505 = vmatprep.subr.mxu0 %v106
    %1506 = vmatpush1.msra.mxu0 %v105
    %1507 = vmatprep.subr.mxu0 %v102
    %1508 = vmatpush1.msra.mxu0 %v101
    %1509 = vmatprep.subr.mxu0 %v98
    %1510 = vmatpush1.msra.mxu0 %v97
    %1511 = vmatprep.subr.mxu0 %v94
    %1512 = vmatpush1.msra.mxu0 %v93
    %1513 = vmatprep.subr.mxu0 %v90
    %1514 = vmatpush1.msra.mxu0 %v89
    %1515 = vmatprep.subr.mxu0 %v86
    %1516 = vmatpush1.msra.mxu0 %v85
    %1517 = vmatprep.subr.mxu0 %v82
    %1518 = vmatpush1.msra.mxu0 %v81
    %1519 = vmatprep.subr.mxu0 %v78
    %1520 = vmatpush1.msra.mxu0 %v77
    %1521 = vmatprep.subr.mxu0 %v74
    %1522 = vmatpush1.msra.mxu0 %v73
    %1523 = vmatprep.subr.mxu0 %v70
    %1524 = vmatpush1.msra.mxu0 %v69
    %1525 = vmatprep.subr.mxu0 0.0
    %1526 = vmatpush2.msra.mxu0 0.0
    %1527 = vmatprep.subr.mxu0 0.0
    %1528 = vmatpush2.msra.mxu0 0.0
    %1529 = vmatprep.subr.mxu0 0.0
    %1530 = vmatpush2.msra.mxu0 0.0
    %1531 = vmatprep.subr.mxu0 0.0
    %1532 = vmatpush2.msra.mxu0 0.0
    %1533 = vmatprep.subr.mxu0 0.0
    %1534 = vmatpush2.msra.mxu0 0.0
    %1535 = vmatprep.subr.mxu0 0.0
    %1536 = vmatpush2.msra.mxu0 0.0
    %1537 = vmatprep.subr.mxu0 0.0
    %1538 = vmatpush2.msra.mxu0 0.0
    %1539 = vmatprep.subr.mxu0 0.0
    %1540 = vmatpush2.msra.mxu0 0.0
    %1541 = vmatprep.subr.mxu0 0.0
    %1542 = vmatpush2.msra.mxu0 0.0
    %1543 = vmatprep.subr.mxu0 0.0
    %1544 = vmatpush2.msra.mxu0 0.0
    %1545 = vmatprep.subr.mxu0 0.0
    %1546 = vmatpush2.msra.mxu0 0.0
    %1547 = vmatprep.subr.mxu0 0.0
    %1548 = vmatpush2.msra.mxu0 0.0
    %1549 = vmatprep.subr.mxu0 0.0
    %1550 = vmatpush2.msra.mxu0 0.0
    %1551 = vmatprep.subr.mxu0 0.0
    %1552 = vmatpush2.msra.mxu0 0.0
    %1553 = vmatprep.subr.mxu0 0.0
    %1554 = vmatpush2.msra.mxu0 0.0
    %1555 = vmatprep.subr.mxu0 0.0
    %1556 = vmatpush2.msra.mxu0 0.0
    %1557 = vmatprep.mubr.f32.mxu0 0.0
    %1558 = vmatmul.mubr.f32.gmra.mxu0 %v1488
    %v1559 = vpop.f32.mrf.mxu0
    %v1560 = vadd.f32 0.0, %v1559
    %v1561 = vpop.f32.mrf.mxu0
    %v1562 = vadd.f32 0.0, %v1561
    %1563 = vdwg.mxu0
    %1564 = vmatprep.subr.mxu0 %v132
    %1565 = vmatpush1.msra.mxu0 %v131
    %1566 = vmatprep.subr.mxu0 %v128
    %1567 = vmatpush1.msra.mxu0 %v127
    %1568 = vmatprep.subr.mxu0 %v124
    %1569 = vmatpush1.msra.mxu0 %v123
    %1570 = vmatprep.subr.mxu0 %v120
    %1571 = vmatpush1.msra.mxu0 %v119
    %1572 = vmatprep.subr.mxu0 %v116
    %1573 = vmatpush1.msra.mxu0 %v115
    %1574 = vmatprep.subr.mxu0 %v112
    %1575 = vmatpush1.msra.mxu0 %v111
    %1576 = vmatprep.subr.mxu0 %v108
    %1577 = vmatpush1.msra.mxu0 %v107
    %1578 = vmatprep.subr.mxu0 %v104
    %1579 = vmatpush1.msra.mxu0 %v103
    %1580 = vmatprep.subr.mxu0 %v100
    %1581 = vmatpush1.msra.mxu0 %v99
    %1582 = vmatprep.subr.mxu0 %v96
    %1583 = vmatpush1.msra.mxu0 %v95
    %1584 = vmatprep.subr.mxu0 %v92
    %1585 = vmatpush1.msra.mxu0 %v91
    %1586 = vmatprep.subr.mxu0 %v88
    %1587 = vmatpush1.msra.mxu0 %v87
    %1588 = vmatprep.subr.mxu0 %v84
    %1589 = vmatpush1.msra.mxu0 %v83
    %1590 = vmatprep.subr.mxu0 %v80
    %1591 = vmatpush1.msra.mxu0 %v79
    %1592 = vmatprep.subr.mxu0 %v76
    %1593 = vmatpush1.msra.mxu0 %v75
    %1594 = vmatprep.subr.mxu0 %v72
    %1595 = vmatpush1.msra.mxu0 %v71
    %1596 = vmatprep.subr.mxu0 0.0
    %1597 = vmatpush2.msra.mxu0 0.0
    %1598 = vmatprep.subr.mxu0 0.0
    %1599 = vmatpush2.msra.mxu0 0.0
    %1600 = vmatprep.subr.mxu0 0.0
    %1601 = vmatpush2.msra.mxu0 0.0
    %1602 = vmatprep.subr.mxu0 0.0
    %1603 = vmatpush2.msra.mxu0 0.0
    %1604 = vmatprep.subr.mxu0 0.0
    %1605 = vmatpush2.msra.mxu0 0.0
    %1606 = vmatprep.subr.mxu0 0.0
    %1607 = vmatpush2.msra.mxu0 0.0
    %1608 = vmatprep.subr.mxu0 0.0
    %1609 = vmatpush2.msra.mxu0 0.0
    %1610 = vmatprep.subr.mxu0 0.0
    %1611 = vmatpush2.msra.mxu0 0.0
    %1612 = vmatprep.subr.mxu0 0.0
    %1613 = vmatpush2.msra.mxu0 0.0
    %1614 = vmatprep.subr.mxu0 0.0
    %1615 = vmatpush2.msra.mxu0 0.0
    %1616 = vmatprep.subr.mxu0 0.0
    %1617 = vmatpush2.msra.mxu0 0.0
    %1618 = vmatprep.subr.mxu0 0.0
    %1619 = vmatpush2.msra.mxu0 0.0
    %1620 = vmatprep.subr.mxu0 0.0
    %1621 = vmatpush2.msra.mxu0 0.0
    %1622 = vmatprep.subr.mxu0 0.0
    %1623 = vmatpush2.msra.mxu0 0.0
    %1624 = vmatprep.subr.mxu0 0.0
    %1625 = vmatpush2.msra.mxu0 0.0
    %1626 = vmatprep.subr.mxu0 0.0
    %1627 = vmatpush2.msra.mxu0 0.0
    %1628 = vmatprep.mubr.f32.mxu0 0.0
    %1629 = vmatmul.mubr.f32.gmra.mxu0 %v1488
    %v1630 = vpop.f32.mrf.mxu0
    %v1631 = vadd.f32 0.0, %v1630
    %v1632 = vpop.f32.mrf.mxu0
    %v1633 = vadd.f32 0.0, %v1632
    %1634 = vdwg.mxu0
    %v1639 = vcombine.low %v1560, %v1562
    %v1640 = vcombine.low %v1631, %v1633
    %v1642 = vunpack.c.l.s4 1983009808
    %v1643 = vunpack.c.0.s8 %v1642
    %v1644 = vlaneseq
    %v1645 = vshrl.u32 %v1644, 7
    %v1646 = vsub.s32 %v1643, %v1645
    %v1647 = vrot.slane %v1639, %v1646
    %v1649 = vunpack.c.l.s4 1983009808
    %v1650 = vunpack.c.0.s8 %v1649
    %v1651 = vlaneseq
    %v1652 = vshrl.u32 %v1651, 7
    %v1653 = vsub.s32 %v1650, %v1652
    %v1654 = vrot.slane %v1640, %v1653
    %v1655 = vcombine.low %v1647, %v1654
    %v1657 = vadd.f32 %v1492, %v1655
    %v1658 = vmul.f32 %v1657, 0.5
    %v1659 = vtanh.pop %v1658
    %v1660 = vadd.f32 %v1659, 1.0
    %v1661 = vmul.f32 %v1660, 0.5
    %v1663 = vrot.slane %v1657, 2
    %v1665 = vmul.f32 %v1663, 0.5
    %v1666 = vtanh.pop %v1665
    %v1667 = vadd.f32 %v1666, 1.0
    %v1668 = vmul.f32 %v1667, 0.5
    %v1669 = vrot.slane %v1657, 4
    %v1671 = vtanh.pop %v1669
    %v1672 = vrot.slane %v1657, 6
    %v1674 = vmul.f32 %v1672, 0.5
    %v1675 = vtanh.pop %v1674
    %v1676 = vadd.f32 %v1675, 1.0
    %v1677 = vmul.f32 %v1676, 0.5
    %v1678 = vmul.f32 %v1668, %v1486
    %v1679 = vmul.f32 %v1661, %v1671
    %v1680 = vadd.f32 %v1678, %v1679
    %v1681 = vtanh.pop %v1680
    %v1682 = vmul.f32 %v1677, %v1681
    %s1683 = scalar_lea.vmem [#allocation10], 14
    %1684 = vst [vmem:[%s1683] sm:$0x3] %v1682
    %1685 = vst [vmem:[#allocation2] sm:$0x3] %v1682
    %1686 = vst [vmem:[#allocation3] sm:$0x3] %v1680
    // Predicated region
    $region34: #{tpu_custom_call.1} parent=1 // pred_check
      %p1687 = pneg %p61
    $region35: #{tpu_custom_call.1} parent=1 // pred_check_branch
      %1689 = sbr.rel (%p1687) target = $region37
    $region36: #{tpu_custom_call.1} parent=1 // pred_region
      %1690 = vst [vmem:[#allocation11] sm:$0x3] %v1682
      %1691 = vst [vmem:[#allocation13] sm:$0x3] %v1680
    $region37: #{tpu_custom_call.1} parent=1 // pred_fallthru
      _
    // Predicated region
    $region38: #{tpu_custom_call.1} parent=1 // pred_check
      _
    $region39: #{tpu_custom_call.1} parent=1 // pred_check_branch
      %1693 = sbr.rel (0) target = $region41
    $region40: #{tpu_custom_call.1} parent=1 // pred_region
      %s1695 = ssub.s32 256, 256
      %1696 = vsyncadd [#allocation6], %s1695
      %s1697 = sshll.u32 [#allocation10], 4
      %s1698 = int_to_ptr.vmem [resolvable:$true] %s1697
      %1703 = dma.vmem_to_hbm [thread:$0]  %s1698, 256, %s4, [#allocation6], 32, 32, 2
    $region41: #{tpu_custom_call.1} parent=1 // pred_fallthru
      _
    // Predicated region
    $region42: #{tpu_custom_call.1} parent=1 // pred_check
      _
    $region43: #{tpu_custom_call.1} parent=1 // pred_check_branch
      %1705 = sbr.rel (0) target = $region45
    $region44: #{tpu_custom_call.1} parent=1 // pred_region
      %s1707 = ssub.s32 32, 32
      %1708 = vsyncadd [#allocation12], %s1707
      %s1710 = sshll.u32 [#allocation11], 4
      %s1711 = int_to_ptr.vmem [resolvable:$true] %s1710
      %1713 = dma.vmem_to_hbm [thread:$0]  %s1711, 32, %s5, [#allocation12]
    $region45: #{tpu_custom_call.1} parent=1 // pred_fallthru
      _
    // Predicated region
    $region46: #{tpu_custom_call.1} parent=1 // pred_check
      _
    $region47: #{tpu_custom_call.1} parent=1 // pred_check_branch
      %1715 = sbr.rel (0) target = $region49
    $region48: #{tpu_custom_call.1} parent=1 // pred_region
      %s1717 = ssub.s32 32, 32
      %1718 = vsyncadd [#allocation12], %s1717
      %s1720 = sshll.u32 [#allocation13], 4
      %s1721 = int_to_ptr.vmem [resolvable:$true] %s1720
      %1723 = dma.vmem_to_hbm [thread:$0]  %s1721, 32, %s6, [#allocation12]
    $region49: #{tpu_custom_call.1} parent=1 // pred_fallthru
      _
    // Predicated region
    $region50: #{tpu_custom_call.1} parent=1 // pred_check
      _
    $region51: #{tpu_custom_call.1} parent=1 // pred_check_branch
      %1725 = sbr.rel (0) target = $region53
    $region52: #{tpu_custom_call.1} parent=1 // pred_region
      %1726 = dma.done [#allocation6], 256
    $region53: #{tpu_custom_call.1} parent=1 // pred_fallthru
      _
    // Predicated region
    $region54: #{tpu_custom_call.1} parent=1 // pred_check
      _
    $region55: #{tpu_custom_call.1} parent=1 // pred_check_branch
      %1728 = sbr.rel (0) target = $region57
    $region56: #{tpu_custom_call.1} parent=1 // pred_region
      %1729 = dma.done [#allocation12], 32
    $region57: #{tpu_custom_call.1} parent=1 // pred_fallthru
      _
    // Predicated region
    $region58: #{tpu_custom_call.1} parent=1 // pred_check
      _
    $region59: #{tpu_custom_call.1} parent=1 // pred_check_branch
      %1731 = sbr.rel (0) target = $region61
    $region60: #{tpu_custom_call.1} parent=1 // pred_region
      %1732 = dma.done [#allocation12], 32
    $region61: #{tpu_custom_call.1} parent=1 // pred_fallthru
      _
    %1733 = vsyncpa [#allocation5], 1
    %1734 = vsyncpa [#allocation8], 1
    %1735 = vsyncpa [#allocation6], 1
    %1736 = vsyncpa [#allocation12], 1

</llo_original>
